<compile_context>
chip_gen: v7x
topology: tpu7x:2x2x1
jax: 0.10.0
libtpu: 0.0.40
codegen_flags: <defaults>
</compile_context>

<pallas_src>
import functools
import numpy as np
import jax
import jax.numpy as jnp
from jax import lax
from jax.experimental import pallas as pl
from jax.experimental.pallas import tpu as pltpu

# ----------------------------- configuration -------------------------------
PRM = dict(
    char_len=40, char_emb=16, char_hid=8, char_kmin=1, char_kmax=3,
    tok_len=64, tok_emb=16, tok_hid=32, nlayers=2,
    dropout=0.0, rnn_type='RNN_TANH', direction='left2right',
    wo_tok=False, wo_char=False, tied=False, init_range=0.1,
)
SEQ = 8     # seq_len
BATCH = 2   # nbatch
TOKCH = 8   # characters per token (token_len)

VBLK = 128      # per-tap-slot vocab block width (char vocab + offset word ids < 128)
WP_LANE = 32    # lane offset of the word->layer0 projection inside the lookup table

_VM = pl.BlockSpec(memory_space=pltpu.MemorySpace.VMEM)


# ------------------------------ fused Pallas kernel ------------------------------
def _fused_kernel(ids_ref, h_ref, slab_ref, dec_ref, hid_ref, y_ref, *,
                  S, B, POOL, CH, H, NK,
                  R_FCW, R_WIH0C, R_WHH0, R_W1S, R_DECW, R_BIAS):
    """Entire RNNModel.forward_one (RNN_TANH, left2right, nlayers=2) in one kernel.

    ids_ref  : [N*POOL + N, NK] int32  (im2col'ed char ids, -1 = pad; word ids+40 in col 0)
    h_ref    : [2, B, H] f32 initial hidden
    slab_ref : [552, 128] f32 packed weights (see _pack_slab)
    dec_ref  : [S*B, 128] f32 (lane-dense decoder output, cols >= tok_len are zero)
    hid_ref  : [2, B, H]  f32 final hidden
    y_ref    : [S*B, H]   f32 VMEM scratch for per-step layer-1 outputs
    """
    f32 = jnp.float32
    N = S * B
    NID = ids_ref.shape[0]
    NCK = NK * CH

    # ---- (1) fused lookup matmul: the 3-hot onehot against the block table does
    #          the char embedding lookup, sums ALL conv taps (padding folded in via
    #          -1 ids -> zero rows) and the word half of the layer-0 projection ----
    ids = ids_ref[...]                                                   # [NID, NK]
    iota = lax.broadcasted_iota(jnp.int32, (NID, VBLK), 1)
    oh = jnp.concatenate(
        [(ids[:, j:j + 1] == iota).astype(f32) for j in range(NK)],
        axis=1)                                                          # [NID, NK*128]
    lut = jnp.dot(oh, slab_ref[0:NK * VBLK, :],
                  preferred_element_type=f32)                            # [NID, 128]

    conv = lut[0:N * POOL, 0:NCK]                                        # [N*POOL, 3*CH]
    wproj = lut[N * POOL:N * POOL + N, WP_LANE:WP_LANE + H]              # [N, H]

    # ---- (2) max-pool over the first char_hid positions + bias, fc, tanh ----
    pooled = (jnp.max(conv.reshape(N, POOL, NCK), axis=1)
              + slab_ref[R_BIAS + 0:R_BIAS + 1, 0:NCK])                  # [N, 3*CH]
    emb_char = jnp.tanh(
        jnp.dot(pooled, slab_ref[R_FCW:R_FCW + NCK, 0:CH],
                preferred_element_type=f32)
        + slab_ref[R_BIAS + 1:R_BIAS + 2, 0:CH])                         # [N, CH]

    # ---- (3) layer-0 input projection (word part already folded into `lut`) ----
    xproj0 = (wproj
              + jnp.dot(emb_char, slab_ref[R_WIH0C:R_WIH0C + CH, 0:H],
                        preferred_element_type=f32)
              + slab_ref[R_BIAS + 2:R_BIAS + 3, 0:H])                    # [N, H]

    # ---- (4) 2-layer tanh RNN, fully unrolled; layer 1 = one stacked matmul ----
    whh0 = slab_ref[R_WHH0:R_WHH0 + H, 0:H]                              # [H, H]
    w1s = slab_ref[R_W1S:R_W1S + 2 * H, 0:H]                             # [2H, H]
    b1 = jnp.broadcast_to(slab_ref[R_BIAS + 3:R_BIAS + 4, 0:H], (B, H))  # hoisted
    h0 = h_ref[0]
    h1 = h_ref[1]
    for t in range(S):   # S is a small static constant -> full unroll
        h0 = jnp.tanh(xproj0[t * B:(t + 1) * B, :]
                      + jnp.dot(h0, whh0, preferred_element_type=f32))
        h1 = jnp.tanh(jnp.dot(jnp.concatenate([h0, h1], axis=1), w1s,
                              preferred_element_type=f32) + b1)
        y_ref[t * B:(t + 1) * B, :] = h1
    hid_ref[0] = h0
    hid_ref[1] = h1

    # ---- (5) decoder, 128-lane dense output ----
    dec_ref[...] = (jnp.dot(y_ref[...], slab_ref[R_DECW:R_DECW + H, :],
                            preferred_element_type=f32)
                    + slab_ref[R_BIAS + 4:R_BIAS + 5, :])


# ------------------------------ wrapper-side packing ------------------------------
def _pack_ids(input_word, input_char, prm, POOL, NK):
    """Build the [N*POOL + N, NK] multi-hot id table (im2col chars + offset word ids)."""
    S, B = input_word.shape
    N, T = input_char.shape
    P = prm['char_kmax'] - prm['char_kmin']          # Conv1d padding
    m = jnp.arange(POOL)[:, None] + jnp.arange(NK)[None, :] - P          # [POOL, NK]
    valid = (m >= 0) & (m < T)
    mc = jnp.clip(m, 0, T - 1)
    ic = input_char.astype(jnp.int32)
    char_slots = jnp.where(valid[None], ic[:, mc], -1).reshape(N * POOL, NK)
    word_col = input_word.reshape(N, 1).astype(jnp.int32) + prm['char_len']
    word_rows = jnp.concatenate(
        [word_col, jnp.full((N, NK - 1), -1, jnp.int32)], axis=1)
    return jnp.concatenate([char_slots, word_rows], axis=0)              # [N*(POOL+1), NK]


def _pack_slab(params, prm):
    """Pack every weight/bias into one lane-dense [*, 128] f32 slab + row offsets."""
    f32 = jnp.float32
    E, CH, H = prm['char_emb'], prm['char_hid'], prm['tok_hid']
    Vc, Vw, V = prm['char_len'], prm['tok_len'], prm['tok_len']
    TE = prm['tok_emb']
    NK = prm['char_kmax'] - prm['char_kmin'] + 1
    NCK = NK * CH
    assert Vc + Vw <= VBLK and NCK <= WP_LANE and WP_LANE + H <= 128 and V <= 128

    r0, r1 = params['rnn']
    wih0_t = r0['wih'].T                                      # [TE+CH, H]
    wordproj = params['word_emb'] @ wih0_t[:TE, :]            # [Vw, H]

    blocks = []
    for j in range(NK):     # one 128-row vocab block per conv tap slot
        wmj = jnp.concatenate(
            [params['conv_w'][i][:, :, j].T if j <= i else jnp.zeros((E, CH), f32)
             for i in range(NK)], axis=1)                     # [E, NCK]
        blk = jnp.pad(params['char_emb'] @ wmj,
                      ((0, VBLK - Vc), (0, 128 - NCK)))       # [128, 128]
        if j == 0:          # word rows (ids offset by Vc) carry word_emb @ Wih0[:TE]
            blk = blk + jnp.pad(wordproj, ((Vc, VBLK - Vc - Vw),
                                           (WP_LANE, 128 - WP_LANE - H)))
        blocks.append(blk)

    def lane_pad(x):
        return jnp.pad(x, ((0, 0), (0, 128 - x.shape[1])))

    def row_pad8(x):
        return jnp.pad(x, ((0, (-x.shape[0]) % 8), (0, 0)))

    fcw = row_pad8(lane_pad(params['fc_w'].T))                              # [24, 128]
    wih0c = row_pad8(lane_pad(wih0_t[TE:, :]))                              # [8, 128]
    whh0 = row_pad8(lane_pad(r0['whh'].T))                                  # [32, 128]
    w1s = row_pad8(lane_pad(jnp.concatenate([r1['wih'].T, r1['whh'].T], 0)))  # [64, 128]
    decw = row_pad8(lane_pad(params['dec_w'].T))                            # [32, 128]
    biases = jnp.zeros((8, 128), f32)
    biases = biases.at[0, :NCK].set(jnp.concatenate(params['conv_b'], axis=1)[0])
    biases = biases.at[1, :CH].set(params['fc_b'][0])
    biases = biases.at[2, :H].set((r0['bih'] + r0['bhh'])[0])
    biases = biases.at[3, :H].set((r1['bih'] + r1['bhh'])[0])
    biases = biases.at[4, :V].set(params['dec_b'][0])

    parts = blocks + [fcw, wih0c, whh0, w1s, decw, biases]
    offs, r = {}, NK * VBLK
    offs['R_FCW'] = r;   r += fcw.shape[0]
    offs['R_WIH0C'] = r; r += wih0c.shape[0]
    offs['R_WHH0'] = r;  r += whh0.shape[0]
    offs['R_W1S'] = r;   r += w1s.shape[0]
    offs['R_DECW'] = r;  r += decw.shape[0]
    offs['R_BIAS'] = r;  r += biases.shape[0]
    return jnp.concatenate(parts, axis=0), offs


# ------------------------------ model forward ------------------------------
def rnn_model_forward(params, input_word, input_char, hidden, prm):
    """RNNModel.forward_one (direction='left2right', rnn_type='RNN_TANH').

    input_word: [S, B] int32, input_char: [S*B, T] int32, hidden: [nlayers, B, H]
    returns decoded [S, B, tok_len], hidden [nlayers, B, H]
    """
    S, B = input_word.shape
    N = S * B
    CH, H, V = prm['char_hid'], prm['tok_hid'], prm['tok_len']
    NK = prm['char_kmax'] - prm['char_kmin'] + 1
    POOL = CH        # F.max_pool1d(conved, kernel_size=conved.shape[1]) semantics
    assert prm['nlayers'] == 2 and prm['char_kmin'] == 1 and NK == 3
    assert input_char.shape[0] == N

    ids = _pack_ids(input_word, input_char, prm, POOL, NK)
    slab, offs = _pack_slab(params, prm)

    kernel = functools.partial(_fused_kernel, S=S, B=B, POOL=POOL, CH=CH, H=H,
                               NK=NK, **offs)
    dec_pad, hidden_out = pl.pallas_call(
        kernel,
        out_shape=(jax.ShapeDtypeStruct((N, 128), jnp.float32),
                   jax.ShapeDtypeStruct((prm['nlayers'], B, H), jnp.float32)),
        in_specs=[_VM, _VM, _VM],
        out_specs=(_VM, _VM),
        scratch_shapes=[pltpu.VMEM((N, H), jnp.float32)],
    )(ids, hidden, slab)
    return dec_pad[:, :V].reshape(S, B, V), hidden_out


# ------------------------------ pure-JAX reference ------------------------------
def ref_forward(params, input_word, input_char, hidden, prm):
    S, B = input_word.shape
    P = prm['char_kmax'] - prm['char_kmin']
    H = prm['char_hid']
    emb_word = params['word_emb'][input_word]
    ce = params['char_emb'][input_char]
    xp = jnp.pad(ce, ((0, 0), (P, P), (0, 0)))
    pooled = []
    for i, ksz in enumerate(range(prm['char_kmin'], prm['char_kmax'] + 1)):
        w, b = params['conv_w'][i], params['conv_b'][i]   # [H,E,ksz], [1,H]
        L = ce.shape[1] + 2 * P - ksz + 1
        conv = jnp.stack(
            [sum(xp[:, t + k, :] @ w[:, :, k].T for k in range(ksz)) + b
             for t in range(L)], axis=1)                  # [N, L, H]
        pooled.append(jnp.max(conv[:, :H, :], axis=1))    # max_pool1d(kernel=H)
    emb_char = jnp.tanh(jnp.concatenate(pooled, 1) @ params['fc_w'].T
                        + params['fc_b']).reshape(S, B, H)
    out = jnp.concatenate([emb_word, emb_char], axis=2)
    h_list = []
    for l in range(prm['nlayers']):
        r = params['rnn'][l]
        h = hidden[l]
        ys = []
        for t in range(S):
            h = jnp.tanh(out[t] @ r['wih'].T + r['bih'] + h @ r['whh'].T + r['bhh'])
            ys.append(h)
        out = jnp.stack(ys, 0)
        h_list.append(h)
    dec = out.reshape(S * B, prm['tok_hid']) @ params['dec_w'].T + params['dec_b']
    return dec.reshape(S, B, prm['tok_len']), jnp.stack(h_list, 0)


# ------------------------------ parameter init ------------------------------
def init_params(key, prm):
    ks = jax.random.split(key, 16)
    ir = prm['init_range']
    H, E, TH = prm['char_hid'], prm['char_emb'], prm['tok_hid']
    nk = prm['char_kmax'] - prm['char_kmin'] + 1
    emb_dim = prm['tok_emb'] + H
    params = {
        'word_emb': jax.random.uniform(ks[0], (prm['tok_len'], prm['tok_emb']),
                                       jnp.float32, -ir, ir),
        'char_emb': jax.random.uniform(ks[1], (prm['char_len'], E),
                                       jnp.float32, -ir, ir),
        'fc_w': 0.1 * jax.random.normal(ks[8], (H, H * nk), jnp.float32),
        'fc_b': 0.1 * jax.random.normal(ks[9], (1, H), jnp.float32),
        'dec_w': jax.random.uniform(ks[14], (prm['tok_len'], TH), jnp.float32, -ir, ir),
        'dec_b': jnp.zeros((1, prm['tok_len']), jnp.float32),
    }
    conv_w, conv_b = [], []
    for i, ksz in enumerate(range(prm['char_kmin'], prm['char_kmax'] + 1)):
        conv_w.append(0.1 * jax.random.normal(ks[2 + i], (H, E, ksz), jnp.float32))
        conv_b.append(0.1 * jax.random.normal(ks[5 + i], (1, H), jnp.float32))
    params['conv_w'], params['conv_b'] = conv_w, conv_b
    rnn = []
    for l in range(prm['nlayers']):
        kk = jax.random.split(ks[10 + l], 4)
        inp = emb_dim if l == 0 else TH
        rnn.append(dict(
            wih=0.1 * jax.random.normal(kk[0], (TH, inp), jnp.float32),
            whh=0.1 * jax.random.normal(kk[1], (TH, TH), jnp.float32),
            bih=0.1 * jax.random.normal(kk[2], (1, TH), jnp.float32),
            bhh=0.1 * jax.random.normal(kk[3], (1, TH), jnp.float32),
        ))
    params['rnn'] = rnn
    return params


# ----------------------------------- main -----------------------------------
if __name__ == "__main__":
    # validity of the quirky max_pool1d(kernel=char_hid) / squeeze(2) semantics
    P = PRM['char_kmax'] - PRM['char_kmin']
    for ksz in range(PRM['char_kmin'], PRM['char_kmax'] + 1):
        L = TOKCH + 2 * P - ksz + 1
        assert PRM['char_hid'] <= L < 2 * PRM['char_hid']

    key = jax.random.PRNGKey(0)
    kp, kw, kc = jax.random.split(key, 3)
    params = init_params(kp, PRM)
    input_word = jax.random.randint(kw, (SEQ, BATCH), 0, PRM['tok_len'], jnp.int32)
    input_char = jax.random.randint(kc, (SEQ * BATCH, TOKCH), 0, PRM['char_len'],
                                    jnp.int32)
    hidden0 = jnp.zeros((PRM['nlayers'], BATCH, PRM['tok_hid']), jnp.float32)

    fwd = jax.jit(functools.partial(rnn_model_forward, prm=PRM))
    decoded, hidden = fwd(params, input_word, input_char, hidden0)
    jax.block_until_ready((decoded, hidden))

    assert decoded.shape == (SEQ, BATCH, PRM['tok_len'])
    assert hidden.shape == (PRM['nlayers'], BATCH, PRM['tok_hid'])

    ref_dec, ref_hid = ref_forward(params, input_word, input_char, hidden0, PRM)
    np.testing.assert_allclose(np.asarray(decoded), np.asarray(ref_dec),
                               rtol=1e-4, atol=1e-4)
    np.testing.assert_allclose(np.asarray(hidden), np.asarray(ref_hid),
                               rtol=1e-4, atol=1e-4)
    print("KERNEL_OK")
</pallas_src>

<mosaic_0001>
module attributes {stable_mosaic.version = 11 : i64} {
  func.func @_fused_kernel(%arg0: memref<144x3xi32, #tpu.memory_space<vmem>>, %arg1: memref<2x2x32xf32, #tpu.memory_space<vmem>>, %arg2: memref<552x128xf32, #tpu.memory_space<vmem>>, %arg3: memref<16x128xf32, #tpu.memory_space<vmem>>, %arg4: memref<2x2x32xf32, #tpu.memory_space<vmem>>, %arg5: memref<16x32xf32, #tpu.memory_space<vmem>>) attributes {dimension_semantics = [], scalar_prefetch = 0 : i64, scratch_operands = 1 : i64, tpu.core_type = #tpu.core_type<tc>} {
    %c0 = arith.constant 0 : index
    %c0_0 = arith.constant 0 : index
    %0 = vector.load %arg0[%c0, %c0_0] : memref<144x3xi32, #tpu.memory_space<vmem>>, vector<144x3xi32>
    %1 = tpu.iota {dimensions = array<i32: 1>} : vector<144x128xi32>
    %2 = vector.extract_strided_slice %0 {offsets = [0, 0], sizes = [144, 1], strides = [1, 1]} : vector<144x3xi32> to vector<144x1xi32>
    %3 = vector.broadcast %2 : vector<144x1xi32> to vector<144x128xi32>
    %4 = arith.cmpi eq, %3, %1 : vector<144x128xi32>
    %5 = arith.extui %4 : vector<144x128xi1> to vector<144x128xi32>
    %6 = arith.sitofp %5 : vector<144x128xi32> to vector<144x128xf32>
    %7 = vector.extract_strided_slice %0 {offsets = [0, 1], sizes = [144, 1], strides = [1, 1]} : vector<144x3xi32> to vector<144x1xi32>
    %8 = vector.broadcast %7 : vector<144x1xi32> to vector<144x128xi32>
    %9 = arith.cmpi eq, %8, %1 : vector<144x128xi32>
    %10 = arith.extui %9 : vector<144x128xi1> to vector<144x128xi32>
    %11 = arith.sitofp %10 : vector<144x128xi32> to vector<144x128xf32>
    %12 = vector.extract_strided_slice %0 {offsets = [0, 2], sizes = [144, 1], strides = [1, 1]} : vector<144x3xi32> to vector<144x1xi32>
    %13 = vector.broadcast %12 : vector<144x1xi32> to vector<144x128xi32>
    %14 = arith.cmpi eq, %13, %1 : vector<144x128xi32>
    %15 = arith.extui %14 : vector<144x128xi1> to vector<144x128xi32>
    %16 = arith.sitofp %15 : vector<144x128xi32> to vector<144x128xf32>
    %17 = tpu.concatenate %6, %11, %16 in 1 : vector<144x128xf32>, vector<144x128xf32>, vector<144x128xf32> -> vector<144x384xf32>
    %c0_1 = arith.constant 0 : index
    %c0_2 = arith.constant 0 : index
    %18 = vector.load %arg2[%c0_1, %c0_2] : memref<552x128xf32, #tpu.memory_space<vmem>>, vector<384x128xf32>
    %cst = arith.constant dense<0.000000e+00> : vector<144x128xf32>
    %19 = tpu.matmul %17, %18, %cst {dimension_numbers = #tpu.dot_dimension_numbers<[1], [0], [0], [1], [0, 0, 1, 1], [], []>} : vector<144x384xf32>, vector<384x128xf32>, vector<144x128xf32> -> vector<144x128xf32>
    %20 = vector.extract_strided_slice %19 {offsets = [0, 0], sizes = [128, 24], strides = [1, 1]} : vector<144x128xf32> to vector<128x24xf32>
    %21 = vector.extract_strided_slice %19 {offsets = [128, 32], sizes = [16, 32], strides = [1, 1]} : vector<144x128xf32> to vector<16x32xf32>
    %22 = vector.shape_cast %20 : vector<128x24xf32> to vector<16x8x24xf32>
    %cst_3 = arith.constant dense<0xFF800000> : vector<16x24xf32>
    %23 = vector.multi_reduction <maximumf>, %22, %cst_3 [1] : vector<16x8x24xf32> to vector<16x24xf32>
    %c544 = arith.constant 544 : index
    %c0_4 = arith.constant 0 : index
    %24 = vector.load %arg2[%c544, %c0_4] : memref<552x128xf32, #tpu.memory_space<vmem>>, vector<1x24xf32>
    %25 = vector.broadcast %24 : vector<1x24xf32> to vector<16x24xf32>
    %26 = arith.addf %23, %25 : vector<16x24xf32>
    %c384 = arith.constant 384 : index
    %c0_5 = arith.constant 0 : index
    %27 = vector.load %arg2[%c384, %c0_5] : memref<552x128xf32, #tpu.memory_space<vmem>>, vector<24x8xf32>
    %cst_6 = arith.constant dense<0.000000e+00> : vector<16x8xf32>
    %28 = tpu.matmul %26, %27, %cst_6 {dimension_numbers = #tpu.dot_dimension_numbers<[1], [0], [0], [1], [0, 0, 1, 1], [], []>} : vector<16x24xf32>, vector<24x8xf32>, vector<16x8xf32> -> vector<16x8xf32>
    %c545 = arith.constant 545 : index
    %c0_7 = arith.constant 0 : index
    %29 = vector.load %arg2[%c545, %c0_7] : memref<552x128xf32, #tpu.memory_space<vmem>>, vector<1x8xf32>
    %30 = vector.broadcast %29 : vector<1x8xf32> to vector<16x8xf32>
    %31 = arith.addf %28, %30 : vector<16x8xf32>
    %32 = math.tanh %31 : vector<16x8xf32>
    %c408 = arith.constant 408 : index
    %c0_8 = arith.constant 0 : index
    %33 = vector.load %arg2[%c408, %c0_8] : memref<552x128xf32, #tpu.memory_space<vmem>>, vector<8x32xf32>
    %cst_9 = arith.constant dense<0.000000e+00> : vector<16x32xf32>
    %34 = tpu.matmul %32, %33, %cst_9 {dimension_numbers = #tpu.dot_dimension_numbers<[1], [0], [0], [1], [0, 0, 1, 1], [], []>} : vector<16x8xf32>, vector<8x32xf32>, vector<16x32xf32> -> vector<16x32xf32>
    %35 = arith.addf %21, %34 : vector<16x32xf32>
    %c546 = arith.constant 546 : index
    %c0_10 = arith.constant 0 : index
    %36 = vector.load %arg2[%c546, %c0_10] : memref<552x128xf32, #tpu.memory_space<vmem>>, vector<1x32xf32>
    %37 = vector.broadcast %36 : vector<1x32xf32> to vector<16x32xf32>
    %38 = arith.addf %35, %37 : vector<16x32xf32>
    %c416 = arith.constant 416 : index
    %c0_11 = arith.constant 0 : index
    %39 = vector.load %arg2[%c416, %c0_11] : memref<552x128xf32, #tpu.memory_space<vmem>>, vector<32x32xf32>
    %c448 = arith.constant 448 : index
    %c0_12 = arith.constant 0 : index
    %40 = vector.load %arg2[%c448, %c0_12] : memref<552x128xf32, #tpu.memory_space<vmem>>, vector<64x32xf32>
    %c547 = arith.constant 547 : index
    %c0_13 = arith.constant 0 : index
    %41 = vector.load %arg2[%c547, %c0_13] : memref<552x128xf32, #tpu.memory_space<vmem>>, vector<1x32xf32>
    %42 = vector.shape_cast %41 : vector<1x32xf32> to vector<1x32xf32>
    %43 = vector.broadcast %42 : vector<1x32xf32> to vector<2x32xf32>
    %c0_14 = arith.constant 0 : index
    %c0_15 = arith.constant 0 : index
    %c0_16 = arith.constant 0 : index
    %44 = vector.load %arg1[%c0_14, %c0_15, %c0_16] : memref<2x2x32xf32, #tpu.memory_space<vmem>>, vector<1x2x32xf32>
    %45 = vector.shape_cast %44 : vector<1x2x32xf32> to vector<2x32xf32>
    %c1 = arith.constant 1 : index
    %c0_17 = arith.constant 0 : index
    %c0_18 = arith.constant 0 : index
    %46 = vector.load %arg1[%c1, %c0_17, %c0_18] : memref<2x2x32xf32, #tpu.memory_space<vmem>>, vector<1x2x32xf32>
    %47 = vector.shape_cast %46 : vector<1x2x32xf32> to vector<2x32xf32>
    %48 = vector.extract_strided_slice %38 {offsets = [0, 0], sizes = [2, 32], strides = [1, 1]} : vector<16x32xf32> to vector<2x32xf32>
    %cst_19 = arith.constant dense<0.000000e+00> : vector<2x32xf32>
    %49 = tpu.matmul %45, %39, %cst_19 {dimension_numbers = #tpu.dot_dimension_numbers<[1], [0], [0], [1], [0, 0, 1, 1], [], []>} : vector<2x32xf32>, vector<32x32xf32>, vector<2x32xf32> -> vector<2x32xf32>
    %50 = arith.addf %48, %49 : vector<2x32xf32>
    %51 = math.tanh %50 : vector<2x32xf32>
    %52 = tpu.concatenate %51, %47 in 1 : vector<2x32xf32>, vector<2x32xf32> -> vector<2x64xf32>
    %cst_20 = arith.constant dense<0.000000e+00> : vector<2x32xf32>
    %53 = tpu.matmul %52, %40, %cst_20 {dimension_numbers = #tpu.dot_dimension_numbers<[1], [0], [0], [1], [0, 0, 1, 1], [], []>} : vector<2x64xf32>, vector<64x32xf32>, vector<2x32xf32> -> vector<2x32xf32>
    %54 = arith.addf %53, %43 : vector<2x32xf32>
    %55 = math.tanh %54 : vector<2x32xf32>
    %c0_21 = arith.constant 0 : index
    %c0_22 = arith.constant 0 : index
    %56 = vector.load %arg5[%c0_21, %c0_22] : memref<16x32xf32, #tpu.memory_space<vmem>>, vector<2x32xf32>
    tpu.vector_store %arg5[%c0_21, %c0_22], %55 {strides = array<i32>} : memref<16x32xf32, #tpu.memory_space<vmem>>, vector<2x32xf32>,
    %57 = vector.extract_strided_slice %38 {offsets = [2, 0], sizes = [2, 32], strides = [1, 1]} : vector<16x32xf32> to vector<2x32xf32>
    %cst_23 = arith.constant dense<0.000000e+00> : vector<2x32xf32>
    %58 = tpu.matmul %51, %39, %cst_23 {dimension_numbers = #tpu.dot_dimension_numbers<[1], [0], [0], [1], [0, 0, 1, 1], [], []>} : vector<2x32xf32>, vector<32x32xf32>, vector<2x32xf32> -> vector<2x32xf32>
    %59 = arith.addf %57, %58 : vector<2x32xf32>
    %60 = math.tanh %59 : vector<2x32xf32>
    %61 = tpu.concatenate %60, %55 in 1 : vector<2x32xf32>, vector<2x32xf32> -> vector<2x64xf32>
    %cst_24 = arith.constant dense<0.000000e+00> : vector<2x32xf32>
    %62 = tpu.matmul %61, %40, %cst_24 {dimension_numbers = #tpu.dot_dimension_numbers<[1], [0], [0], [1], [0, 0, 1, 1], [], []>} : vector<2x64xf32>, vector<64x32xf32>, vector<2x32xf32> -> vector<2x32xf32>
    %63 = arith.addf %62, %43 : vector<2x32xf32>
    %64 = math.tanh %63 : vector<2x32xf32>
    %c2 = arith.constant 2 : index
    %c0_25 = arith.constant 0 : index
    %65 = vector.load %arg5[%c2, %c0_25] : memref<16x32xf32, #tpu.memory_space<vmem>>, vector<2x32xf32>
    tpu.vector_store %arg5[%c2, %c0_25], %64 {strides = array<i32>} : memref<16x32xf32, #tpu.memory_space<vmem>>, vector<2x32xf32>,
    %66 = vector.extract_strided_slice %38 {offsets = [4, 0], sizes = [2, 32], strides = [1, 1]} : vector<16x32xf32> to vector<2x32xf32>
    %cst_26 = arith.constant dense<0.000000e+00> : vector<2x32xf32>
    %67 = tpu.matmul %60, %39, %cst_26 {dimension_numbers = #tpu.dot_dimension_numbers<[1], [0], [0], [1], [0, 0, 1, 1], [], []>} : vector<2x32xf32>, vector<32x32xf32>, vector<2x32xf32> -> vector<2x32xf32>
    %68 = arith.addf %66, %67 : vector<2x32xf32>
    %69 = math.tanh %68 : vector<2x32xf32>
    %70 = tpu.concatenate %69, %64 in 1 : vector<2x32xf32>, vector<2x32xf32> -> vector<2x64xf32>
    %cst_27 = arith.constant dense<0.000000e+00> : vector<2x32xf32>
    %71 = tpu.matmul %70, %40, %cst_27 {dimension_numbers = #tpu.dot_dimension_numbers<[1], [0], [0], [1], [0, 0, 1, 1], [], []>} : vector<2x64xf32>, vector<64x32xf32>, vector<2x32xf32> -> vector<2x32xf32>
    %72 = arith.addf %71, %43 : vector<2x32xf32>
    %73 = math.tanh %72 : vector<2x32xf32>
    %c4 = arith.constant 4 : index
    %c0_28 = arith.constant 0 : index
    %74 = vector.load %arg5[%c4, %c0_28] : memref<16x32xf32, #tpu.memory_space<vmem>>, vector<2x32xf32>
    tpu.vector_store %arg5[%c4, %c0_28], %73 {strides = array<i32>} : memref<16x32xf32, #tpu.memory_space<vmem>>, vector<2x32xf32>,
    %75 = vector.extract_strided_slice %38 {offsets = [6, 0], sizes = [2, 32], strides = [1, 1]} : vector<16x32xf32> to vector<2x32xf32>
    %cst_29 = arith.constant dense<0.000000e+00> : vector<2x32xf32>
    %76 = tpu.matmul %69, %39, %cst_29 {dimension_numbers = #tpu.dot_dimension_numbers<[1], [0], [0], [1], [0, 0, 1, 1], [], []>} : vector<2x32xf32>, vector<32x32xf32>, vector<2x32xf32> -> vector<2x32xf32>
    %77 = arith.addf %75, %76 : vector<2x32xf32>
    %78 = math.tanh %77 : vector<2x32xf32>
    %79 = tpu.concatenate %78, %73 in 1 : vector<2x32xf32>, vector<2x32xf32> -> vector<2x64xf32>
    %cst_30 = arith.constant dense<0.000000e+00> : vector<2x32xf32>
    %80 = tpu.matmul %79, %40, %cst_30 {dimension_numbers = #tpu.dot_dimension_numbers<[1], [0], [0], [1], [0, 0, 1, 1], [], []>} : vector<2x64xf32>, vector<64x32xf32>, vector<2x32xf32> -> vector<2x32xf32>
    %81 = arith.addf %80, %43 : vector<2x32xf32>
    %82 = math.tanh %81 : vector<2x32xf32>
    %c6 = arith.constant 6 : index
    %c0_31 = arith.constant 0 : index
    %83 = vector.load %arg5[%c6, %c0_31] : memref<16x32xf32, #tpu.memory_space<vmem>>, vector<2x32xf32>
    tpu.vector_store %arg5[%c6, %c0_31], %82 {strides = array<i32>} : memref<16x32xf32, #tpu.memory_space<vmem>>, vector<2x32xf32>,
    %84 = vector.extract_strided_slice %38 {offsets = [8, 0], sizes = [2, 32], strides = [1, 1]} : vector<16x32xf32> to vector<2x32xf32>
    %cst_32 = arith.constant dense<0.000000e+00> : vector<2x32xf32>
    %85 = tpu.matmul %78, %39, %cst_32 {dimension_numbers = #tpu.dot_dimension_numbers<[1], [0], [0], [1], [0, 0, 1, 1], [], []>} : vector<2x32xf32>, vector<32x32xf32>, vector<2x32xf32> -> vector<2x32xf32>
    %86 = arith.addf %84, %85 : vector<2x32xf32>
    %87 = math.tanh %86 : vector<2x32xf32>
    %88 = tpu.concatenate %87, %82 in 1 : vector<2x32xf32>, vector<2x32xf32> -> vector<2x64xf32>
    %cst_33 = arith.constant dense<0.000000e+00> : vector<2x32xf32>
    %89 = tpu.matmul %88, %40, %cst_33 {dimension_numbers = #tpu.dot_dimension_numbers<[1], [0], [0], [1], [0, 0, 1, 1], [], []>} : vector<2x64xf32>, vector<64x32xf32>, vector<2x32xf32> -> vector<2x32xf32>
    %90 = arith.addf %89, %43 : vector<2x32xf32>
    %91 = math.tanh %90 : vector<2x32xf32>
    %c8 = arith.constant 8 : index
    %c0_34 = arith.constant 0 : index
    %92 = vector.load %arg5[%c8, %c0_34] : memref<16x32xf32, #tpu.memory_space<vmem>>, vector<2x32xf32>
    tpu.vector_store %arg5[%c8, %c0_34], %91 {strides = array<i32>} : memref<16x32xf32, #tpu.memory_space<vmem>>, vector<2x32xf32>,
    %93 = vector.extract_strided_slice %38 {offsets = [10, 0], sizes = [2, 32], strides = [1, 1]} : vector<16x32xf32> to vector<2x32xf32>
    %cst_35 = arith.constant dense<0.000000e+00> : vector<2x32xf32>
    %94 = tpu.matmul %87, %39, %cst_35 {dimension_numbers = #tpu.dot_dimension_numbers<[1], [0], [0], [1], [0, 0, 1, 1], [], []>} : vector<2x32xf32>, vector<32x32xf32>, vector<2x32xf32> -> vector<2x32xf32>
    %95 = arith.addf %93, %94 : vector<2x32xf32>
    %96 = math.tanh %95 : vector<2x32xf32>
    %97 = tpu.concatenate %96, %91 in 1 : vector<2x32xf32>, vector<2x32xf32> -> vector<2x64xf32>
    %cst_36 = arith.constant dense<0.000000e+00> : vector<2x32xf32>
    %98 = tpu.matmul %97, %40, %cst_36 {dimension_numbers = #tpu.dot_dimension_numbers<[1], [0], [0], [1], [0, 0, 1, 1], [], []>} : vector<2x64xf32>, vector<64x32xf32>, vector<2x32xf32> -> vector<2x32xf32>
    %99 = arith.addf %98, %43 : vector<2x32xf32>
    %100 = math.tanh %99 : vector<2x32xf32>
    %c10 = arith.constant 10 : index
    %c0_37 = arith.constant 0 : index
    %101 = vector.load %arg5[%c10, %c0_37] : memref<16x32xf32, #tpu.memory_space<vmem>>, vector<2x32xf32>
    tpu.vector_store %arg5[%c10, %c0_37], %100 {strides = array<i32>} : memref<16x32xf32, #tpu.memory_space<vmem>>, vector<2x32xf32>,
    %102 = vector.extract_strided_slice %38 {offsets = [12, 0], sizes = [2, 32], strides = [1, 1]} : vector<16x32xf32> to vector<2x32xf32>
    %cst_38 = arith.constant dense<0.000000e+00> : vector<2x32xf32>
    %103 = tpu.matmul %96, %39, %cst_38 {dimension_numbers = #tpu.dot_dimension_numbers<[1], [0], [0], [1], [0, 0, 1, 1], [], []>} : vector<2x32xf32>, vector<32x32xf32>, vector<2x32xf32> -> vector<2x32xf32>
    %104 = arith.addf %102, %103 : vector<2x32xf32>
    %105 = math.tanh %104 : vector<2x32xf32>
    %106 = tpu.concatenate %105, %100 in 1 : vector<2x32xf32>, vector<2x32xf32> -> vector<2x64xf32>
    %cst_39 = arith.constant dense<0.000000e+00> : vector<2x32xf32>
    %107 = tpu.matmul %106, %40, %cst_39 {dimension_numbers = #tpu.dot_dimension_numbers<[1], [0], [0], [1], [0, 0, 1, 1], [], []>} : vector<2x64xf32>, vector<64x32xf32>, vector<2x32xf32> -> vector<2x32xf32>
    %108 = arith.addf %107, %43 : vector<2x32xf32>
    %109 = math.tanh %108 : vector<2x32xf32>
    %c12 = arith.constant 12 : index
    %c0_40 = arith.constant 0 : index
    %110 = vector.load %arg5[%c12, %c0_40] : memref<16x32xf32, #tpu.memory_space<vmem>>, vector<2x32xf32>
    tpu.vector_store %arg5[%c12, %c0_40], %109 {strides = array<i32>} : memref<16x32xf32, #tpu.memory_space<vmem>>, vector<2x32xf32>,
    %111 = vector.extract_strided_slice %38 {offsets = [14, 0], sizes = [2, 32], strides = [1, 1]} : vector<16x32xf32> to vector<2x32xf32>
    %cst_41 = arith.constant dense<0.000000e+00> : vector<2x32xf32>
    %112 = tpu.matmul %105, %39, %cst_41 {dimension_numbers = #tpu.dot_dimension_numbers<[1], [0], [0], [1], [0, 0, 1, 1], [], []>} : vector<2x32xf32>, vector<32x32xf32>, vector<2x32xf32> -> vector<2x32xf32>
    %113 = arith.addf %111, %112 : vector<2x32xf32>
    %114 = math.tanh %113 : vector<2x32xf32>
    %115 = tpu.concatenate %114, %109 in 1 : vector<2x32xf32>, vector<2x32xf32> -> vector<2x64xf32>
    %cst_42 = arith.constant dense<0.000000e+00> : vector<2x32xf32>
    %116 = tpu.matmul %115, %40, %cst_42 {dimension_numbers = #tpu.dot_dimension_numbers<[1], [0], [0], [1], [0, 0, 1, 1], [], []>} : vector<2x64xf32>, vector<64x32xf32>, vector<2x32xf32> -> vector<2x32xf32>
    %117 = arith.addf %116, %43 : vector<2x32xf32>
    %118 = math.tanh %117 : vector<2x32xf32>
    %c14 = arith.constant 14 : index
    %c0_43 = arith.constant 0 : index
    %119 = vector.load %arg5[%c14, %c0_43] : memref<16x32xf32, #tpu.memory_space<vmem>>, vector<2x32xf32>
    tpu.vector_store %arg5[%c14, %c0_43], %118 {strides = array<i32>} : memref<16x32xf32, #tpu.memory_space<vmem>>, vector<2x32xf32>,
    %c0_44 = arith.constant 0 : index
    %c0_45 = arith.constant 0 : index
    %c0_46 = arith.constant 0 : index
    %120 = vector.load %arg4[%c0_44, %c0_45, %c0_46] : memref<2x2x32xf32, #tpu.memory_space<vmem>>, vector<1x2x32xf32>
    %121 = vector.shape_cast %120 : vector<1x2x32xf32> to vector<2x32xf32>
    %122 = vector.shape_cast %114 : vector<2x32xf32> to vector<1x2x32xf32>
    tpu.vector_store %arg4[%c0_44, %c0_45, %c0_46], %122 {strides = array<i32>} : memref<2x2x32xf32, #tpu.memory_space<vmem>>, vector<1x2x32xf32>,
    %c1_47 = arith.constant 1 : index
    %c0_48 = arith.constant 0 : index
    %c0_49 = arith.constant 0 : index
    %123 = vector.load %arg4[%c1_47, %c0_48, %c0_49] : memref<2x2x32xf32, #tpu.memory_space<vmem>>, vector<1x2x32xf32>
    %124 = vector.shape_cast %123 : vector<1x2x32xf32> to vector<2x32xf32>
    %125 = vector.shape_cast %118 : vector<2x32xf32> to vector<1x2x32xf32>
    tpu.vector_store %arg4[%c1_47, %c0_48, %c0_49], %125 {strides = array<i32>} : memref<2x2x32xf32, #tpu.memory_space<vmem>>, vector<1x2x32xf32>,
    %c0_50 = arith.constant 0 : index
    %c0_51 = arith.constant 0 : index
    %126 = vector.load %arg5[%c0_50, %c0_51] : memref<16x32xf32, #tpu.memory_space<vmem>>, vector<16x32xf32>
    %c512 = arith.constant 512 : index
    %c0_52 = arith.constant 0 : index
    %127 = vector.load %arg2[%c512, %c0_52] : memref<552x128xf32, #tpu.memory_space<vmem>>, vector<32x128xf32>
    %cst_53 = arith.constant dense<0.000000e+00> : vector<16x128xf32>
    %128 = tpu.matmul %126, %127, %cst_53 {dimension_numbers = #tpu.dot_dimension_numbers<[1], [0], [0], [1], [0, 0, 1, 1], [], []>} : vector<16x32xf32>, vector<32x128xf32>, vector<16x128xf32> -> vector<16x128xf32>
    %c548 = arith.constant 548 : index
    %c0_54 = arith.constant 0 : index
    %129 = vector.load %arg2[%c548, %c0_54] : memref<552x128xf32, #tpu.memory_space<vmem>>, vector<1x128xf32>
    %130 = vector.broadcast %129 : vector<1x128xf32> to vector<16x128xf32>
    %131 = arith.addf %128, %130 : vector<16x128xf32>
    %c0_55 = arith.constant 0 : index
    %c0_56 = arith.constant 0 : index
    %132 = vector.load %arg3[%c0_55, %c0_56] : memref<16x128xf32, #tpu.memory_space<vmem>>, vector<16x128xf32>
    tpu.vector_store %arg3[%c0_55, %c0_56], %131 {strides = array<i32>} : memref<16x128xf32, #tpu.memory_space<vmem>>, vector<16x128xf32>,
    return
  }
}

</mosaic_0001>

<llo_original>
// kernel: rnn_model_forward.1
$region0: #{rnn_model_forward.1}
  #allocation0 [shape = 'u32[]', space=smem, size = 0x4, offset = 0x4, fixed_abs, tag = 'smem constant byte address 0x4 - core index']
  #allocation1 [shape = 'u32[144,128]{1,0:T(1,128)}', space=vmem, size = 0x12000, scoped, tag = 'internal scratch']
  #allocation2 [shape = 'f32[16,32]{1,0:T(8,128)}', space=vmem, size = 0x2000, scoped, tag = 'scratch operand']
  %s0 = inlined_call_operand.vmem [shape: s32[144,3], index: 0, kind: input, shape index: {}]
  %s1 = inlined_call_operand.vmem [shape: f32[2,2,32], index: 1, kind: input, shape index: {}]
  %s2 = inlined_call_operand.vmem [shape: f32[552,128], index: 2, kind: input, shape index: {}]
  %s3 = inlined_call_operand.hbm [shape: f32[16,128], index: 3, kind: output, shape index: {0}]
  %s4 = inlined_call_operand.hbm [shape: f32[2,2,32], index: 4, kind: output, shape index: {1}]
  %5 = xla_tuple %s3, %s4
  %s6 = sld [smem:[#allocation0]]
  $region30: #{rnn_model_forward.1} parent=0
    _
  %s8 = ssub.s32 1, %s6
  %s9 = scalar_select 0, %s8, %s6
  $region1: #{rnn_model_forward.1} parent=0
    #allocation3 [shape = 'u8[8192]{0}', space=vmem, size = 0x2000, scoped, tag = 'output window, operand 0, single buffered']
    #allocation4 [shape = 's32[1]{0}', space=sflag, size = 0x4, scoped, tag = 'scoped memory for rnn_model_forward.1']
    #allocation5 [shape = 'u8[2048]{0}', space=vmem, size = 0x800, scoped, tag = 'output window, operand 1, single buffered']
    #allocation6 [shape = 's32[1]{0}', space=sflag, size = 0x4, scoped, tag = 'scoped memory for rnn_model_forward.1']
    %10 = vsyncpa [#allocation4], 0
    %11 = vsyncpa [#allocation6], 0
    // Predicated region
    $region2: #{rnn_model_forward.1} parent=1 // pred_check
      _
    $region3: #{rnn_model_forward.1} parent=1 // pred_check_branch
      %13 = sbr.rel (0) target = $region5
    $region4: #{rnn_model_forward.1} parent=1 // pred_region
      _
    $region5: #{rnn_model_forward.1} parent=1 // pred_fallthru
      _
    // Predicated region
    $region6: #{rnn_model_forward.1} parent=1 // pred_check
      _
    $region7: #{rnn_model_forward.1} parent=1 // pred_check_branch
      %15 = sbr.rel (0) target = $region9
    $region8: #{rnn_model_forward.1} parent=1 // pred_region
      _
    $region9: #{rnn_model_forward.1} parent=1 // pred_fallthru
      _
    // Predicated region
    $region10: #{rnn_model_forward.1} parent=1 // pred_check
      _
    $region11: #{rnn_model_forward.1} parent=1 // pred_check_branch
      %17 = sbr.rel (0) target = $region13
    $region12: #{rnn_model_forward.1} parent=1 // pred_region
      _
    $region13: #{rnn_model_forward.1} parent=1 // pred_fallthru
      _
    %v18 = vld [vmem:[%s0] sm:$0xff]
    %v19 = vld [vmem:[%s0 + $0x8] sm:$0xff]
    %v20 = vld [vmem:[%s0 + $0x10] sm:$0xff]
    %v21 = vld [vmem:[%s0 + $0x18] sm:$0xff]
    %v22 = vld [vmem:[%s0 + $0x20] sm:$0xff]
    %v23 = vld [vmem:[%s0 + $0x28] sm:$0xff]
    %v24 = vld [vmem:[%s0 + $0x30] sm:$0xff]
    %v25 = vld [vmem:[%s0 + $0x38] sm:$0xff]
    %v26 = vld [vmem:[%s0 + $0x40] sm:$0xff]
    %v27 = vld [vmem:[%s0 + $0x48] sm:$0xff]
    %v28 = vld [vmem:[%s0 + $0x50] sm:$0xff]
    %v29 = vld [vmem:[%s0 + $0x58] sm:$0xff]
    %v30 = vld [vmem:[%s0 + $0x60] sm:$0xff]
    %v31 = vld [vmem:[%s0 + $0x68] sm:$0xff]
    %v32 = vld [vmem:[%s0 + $0x70] sm:$0xff]
    %v33 = vld [vmem:[%s0 + $0x78] sm:$0xff]
    %v34 = vld [vmem:[%s0 + $0x80] sm:$0xff]
    %v35 = vld [vmem:[%s0 + $0x88] sm:$0xff]
    %v36 = vlaneseq
    %v37 = vand.u32 %v36, 127
    %38 = vset.pattern.permute.xlu0 0
    %39 = vperm.xlu0 %38, %v18
    %v40 = vpop.permute.xlu0 %39
    %41 = vset.pattern.permute.xlu0 0
    %42 = vperm.xlu0 %41, %v19
    %v43 = vpop.permute.xlu0 %42
    %44 = vset.pattern.permute.xlu0 0
    %45 = vperm.xlu0 %44, %v20
    %v46 = vpop.permute.xlu0 %45
    %47 = vset.pattern.permute.xlu0 0
    %48 = vperm.xlu0 %47, %v21
    %v49 = vpop.permute.xlu0 %48
    %50 = vset.pattern.permute.xlu0 0
    %51 = vperm.xlu0 %50, %v22
    %v52 = vpop.permute.xlu0 %51
    %53 = vset.pattern.permute.xlu0 0
    %54 = vperm.xlu0 %53, %v23
    %v55 = vpop.permute.xlu0 %54
    %56 = vset.pattern.permute.xlu0 0
    %57 = vperm.xlu0 %56, %v24
    %v58 = vpop.permute.xlu0 %57
    %59 = vset.pattern.permute.xlu0 0
    %60 = vperm.xlu0 %59, %v25
    %v61 = vpop.permute.xlu0 %60
    %62 = vset.pattern.permute.xlu0 0
    %63 = vperm.xlu0 %62, %v26
    %v64 = vpop.permute.xlu0 %63
    %65 = vset.pattern.permute.xlu0 0
    %66 = vperm.xlu0 %65, %v27
    %v67 = vpop.permute.xlu0 %66
    %68 = vset.pattern.permute.xlu0 0
    %69 = vperm.xlu0 %68, %v28
    %v70 = vpop.permute.xlu0 %69
    %71 = vset.pattern.permute.xlu0 0
    %72 = vperm.xlu0 %71, %v29
    %v73 = vpop.permute.xlu0 %72
    %74 = vset.pattern.permute.xlu0 0
    %75 = vperm.xlu0 %74, %v30
    %v76 = vpop.permute.xlu0 %75
    %77 = vset.pattern.permute.xlu0 0
    %78 = vperm.xlu0 %77, %v31
    %v79 = vpop.permute.xlu0 %78
    %80 = vset.pattern.permute.xlu0 0
    %81 = vperm.xlu0 %80, %v32
    %v82 = vpop.permute.xlu0 %81
    %83 = vset.pattern.permute.xlu0 0
    %84 = vperm.xlu0 %83, %v33
    %v85 = vpop.permute.xlu0 %84
    %86 = vset.pattern.permute.xlu0 0
    %87 = vperm.xlu0 %86, %v34
    %v88 = vpop.permute.xlu0 %87
    %89 = vset.pattern.permute.xlu0 0
    %90 = vperm.xlu0 %89, %v35
    %v91 = vpop.permute.xlu0 %90
    %vm92 = vcmp.eq.s32.totalorder %v40, %v37
    %vm93 = vcmp.eq.s32.totalorder %v43, %v37
    %vm94 = vcmp.eq.s32.totalorder %v46, %v37
    %vm95 = vcmp.eq.s32.totalorder %v49, %v37
    %vm96 = vcmp.eq.s32.totalorder %v52, %v37
    %vm97 = vcmp.eq.s32.totalorder %v55, %v37
    %vm98 = vcmp.eq.s32.totalorder %v58, %v37
    %vm99 = vcmp.eq.s32.totalorder %v61, %v37
    %vm100 = vcmp.eq.s32.totalorder %v64, %v37
    %vm101 = vcmp.eq.s32.totalorder %v67, %v37
    %vm102 = vcmp.eq.s32.totalorder %v70, %v37
    %vm103 = vcmp.eq.s32.totalorder %v73, %v37
    %vm104 = vcmp.eq.s32.totalorder %v76, %v37
    %vm105 = vcmp.eq.s32.totalorder %v79, %v37
    %vm106 = vcmp.eq.s32.totalorder %v82, %v37
    %vm107 = vcmp.eq.s32.totalorder %v85, %v37
    %vm108 = vcmp.eq.s32.totalorder %v88, %v37
    %vm109 = vcmp.eq.s32.totalorder %v91, %v37
    %v110 = vsel %vm92, 1, 0
    %v111 = vsel %vm93, 1, 0
    %v112 = vsel %vm94, 1, 0
    %v113 = vsel %vm95, 1, 0
    %v114 = vsel %vm96, 1, 0
    %v115 = vsel %vm97, 1, 0
    %v116 = vsel %vm98, 1, 0
    %v117 = vsel %vm99, 1, 0
    %v118 = vsel %vm100, 1, 0
    %v119 = vsel %vm101, 1, 0
    %v120 = vsel %vm102, 1, 0
    %v121 = vsel %vm103, 1, 0
    %v122 = vsel %vm104, 1, 0
    %v123 = vsel %vm105, 1, 0
    %v124 = vsel %vm106, 1, 0
    %v125 = vsel %vm107, 1, 0
    %v126 = vsel %vm108, 1, 0
    %v127 = vsel %vm109, 1, 0
    %v128 = vcvt.s32.f32 %v110
    %v129 = vcvt.s32.f32 %v111
    %v130 = vcvt.s32.f32 %v112
    %v131 = vcvt.s32.f32 %v113
    %v132 = vcvt.s32.f32 %v114
    %v133 = vcvt.s32.f32 %v115
    %v134 = vcvt.s32.f32 %v116
    %v135 = vcvt.s32.f32 %v117
    %v136 = vcvt.s32.f32 %v118
    %v137 = vcvt.s32.f32 %v119
    %v138 = vcvt.s32.f32 %v120
    %v139 = vcvt.s32.f32 %v121
    %v140 = vcvt.s32.f32 %v122
    %v141 = vcvt.s32.f32 %v123
    %v142 = vcvt.s32.f32 %v124
    %v143 = vcvt.s32.f32 %v125
    %v144 = vcvt.s32.f32 %v126
    %v145 = vcvt.s32.f32 %v127
    %146 = vset.pattern.permute.xlu0 1
    %147 = vperm.xlu0 %146, %v18
    %v148 = vpop.permute.xlu0 %147
    %149 = vset.pattern.permute.xlu0 1
    %150 = vperm.xlu0 %149, %v19
    %v151 = vpop.permute.xlu0 %150
    %152 = vset.pattern.permute.xlu0 1
    %153 = vperm.xlu0 %152, %v20
    %v154 = vpop.permute.xlu0 %153
    %155 = vset.pattern.permute.xlu0 1
    %156 = vperm.xlu0 %155, %v21
    %v157 = vpop.permute.xlu0 %156
    %158 = vset.pattern.permute.xlu0 1
    %159 = vperm.xlu0 %158, %v22
    %v160 = vpop.permute.xlu0 %159
    %161 = vset.pattern.permute.xlu0 1
    %162 = vperm.xlu0 %161, %v23
    %v163 = vpop.permute.xlu0 %162
    %164 = vset.pattern.permute.xlu0 1
    %165 = vperm.xlu0 %164, %v24
    %v166 = vpop.permute.xlu0 %165
    %167 = vset.pattern.permute.xlu0 1
    %168 = vperm.xlu0 %167, %v25
    %v169 = vpop.permute.xlu0 %168
    %170 = vset.pattern.permute.xlu0 1
    %171 = vperm.xlu0 %170, %v26
    %v172 = vpop.permute.xlu0 %171
    %173 = vset.pattern.permute.xlu0 1
    %174 = vperm.xlu0 %173, %v27
    %v175 = vpop.permute.xlu0 %174
    %176 = vset.pattern.permute.xlu0 1
    %177 = vperm.xlu0 %176, %v28
    %v178 = vpop.permute.xlu0 %177
    %179 = vset.pattern.permute.xlu0 1
    %180 = vperm.xlu0 %179, %v29
    %v181 = vpop.permute.xlu0 %180
    %182 = vset.pattern.permute.xlu0 1
    %183 = vperm.xlu0 %182, %v30
    %v184 = vpop.permute.xlu0 %183
    %185 = vset.pattern.permute.xlu0 1
    %186 = vperm.xlu0 %185, %v31
    %v187 = vpop.permute.xlu0 %186
    %188 = vset.pattern.permute.xlu0 1
    %189 = vperm.xlu0 %188, %v32
    %v190 = vpop.permute.xlu0 %189
    %191 = vset.pattern.permute.xlu0 1
    %192 = vperm.xlu0 %191, %v33
    %v193 = vpop.permute.xlu0 %192
    %194 = vset.pattern.permute.xlu0 1
    %195 = vperm.xlu0 %194, %v34
    %v196 = vpop.permute.xlu0 %195
    %197 = vset.pattern.permute.xlu0 1
    %198 = vperm.xlu0 %197, %v35
    %v199 = vpop.permute.xlu0 %198
    %vm200 = vcmp.eq.s32.totalorder %v148, %v37
    %vm201 = vcmp.eq.s32.totalorder %v151, %v37
    %vm202 = vcmp.eq.s32.totalorder %v154, %v37
    %vm203 = vcmp.eq.s32.totalorder %v157, %v37
    %vm204 = vcmp.eq.s32.totalorder %v160, %v37
    %vm205 = vcmp.eq.s32.totalorder %v163, %v37
    %vm206 = vcmp.eq.s32.totalorder %v166, %v37
    %vm207 = vcmp.eq.s32.totalorder %v169, %v37
    %vm208 = vcmp.eq.s32.totalorder %v172, %v37
    %vm209 = vcmp.eq.s32.totalorder %v175, %v37
    %vm210 = vcmp.eq.s32.totalorder %v178, %v37
    %vm211 = vcmp.eq.s32.totalorder %v181, %v37
    %vm212 = vcmp.eq.s32.totalorder %v184, %v37
    %vm213 = vcmp.eq.s32.totalorder %v187, %v37
    %vm214 = vcmp.eq.s32.totalorder %v190, %v37
    %vm215 = vcmp.eq.s32.totalorder %v193, %v37
    %vm216 = vcmp.eq.s32.totalorder %v196, %v37
    %vm217 = vcmp.eq.s32.totalorder %v199, %v37
    %v218 = vsel %vm200, 1, 0
    %v219 = vsel %vm201, 1, 0
    %v220 = vsel %vm202, 1, 0
    %v221 = vsel %vm203, 1, 0
    %v222 = vsel %vm204, 1, 0
    %v223 = vsel %vm205, 1, 0
    %v224 = vsel %vm206, 1, 0
    %v225 = vsel %vm207, 1, 0
    %v226 = vsel %vm208, 1, 0
    %v227 = vsel %vm209, 1, 0
    %v228 = vsel %vm210, 1, 0
    %v229 = vsel %vm211, 1, 0
    %v230 = vsel %vm212, 1, 0
    %v231 = vsel %vm213, 1, 0
    %v232 = vsel %vm214, 1, 0
    %v233 = vsel %vm215, 1, 0
    %v234 = vsel %vm216, 1, 0
    %v235 = vsel %vm217, 1, 0
    %v236 = vcvt.s32.f32 %v218
    %v237 = vcvt.s32.f32 %v219
    %v238 = vcvt.s32.f32 %v220
    %v239 = vcvt.s32.f32 %v221
    %v240 = vcvt.s32.f32 %v222
    %v241 = vcvt.s32.f32 %v223
    %v242 = vcvt.s32.f32 %v224
    %v243 = vcvt.s32.f32 %v225
    %v244 = vcvt.s32.f32 %v226
    %v245 = vcvt.s32.f32 %v227
    %v246 = vcvt.s32.f32 %v228
    %v247 = vcvt.s32.f32 %v229
    %v248 = vcvt.s32.f32 %v230
    %v249 = vcvt.s32.f32 %v231
    %v250 = vcvt.s32.f32 %v232
    %v251 = vcvt.s32.f32 %v233
    %v252 = vcvt.s32.f32 %v234
    %v253 = vcvt.s32.f32 %v235
    %254 = vset.pattern.permute.xlu0 2
    %255 = vperm.xlu0 %254, %v18
    %v256 = vpop.permute.xlu0 %255
    %257 = vset.pattern.permute.xlu0 2
    %258 = vperm.xlu0 %257, %v19
    %v259 = vpop.permute.xlu0 %258
    %260 = vset.pattern.permute.xlu0 2
    %261 = vperm.xlu0 %260, %v20
    %v262 = vpop.permute.xlu0 %261
    %263 = vset.pattern.permute.xlu0 2
    %264 = vperm.xlu0 %263, %v21
    %v265 = vpop.permute.xlu0 %264
    %266 = vset.pattern.permute.xlu0 2
    %267 = vperm.xlu0 %266, %v22
    %v268 = vpop.permute.xlu0 %267
    %269 = vset.pattern.permute.xlu0 2
    %270 = vperm.xlu0 %269, %v23
    %v271 = vpop.permute.xlu0 %270
    %272 = vset.pattern.permute.xlu0 2
    %273 = vperm.xlu0 %272, %v24
    %v274 = vpop.permute.xlu0 %273
    %275 = vset.pattern.permute.xlu0 2
    %276 = vperm.xlu0 %275, %v25
    %v277 = vpop.permute.xlu0 %276
    %278 = vset.pattern.permute.xlu0 2
    %279 = vperm.xlu0 %278, %v26
    %v280 = vpop.permute.xlu0 %279
    %281 = vset.pattern.permute.xlu0 2
    %282 = vperm.xlu0 %281, %v27
    %v283 = vpop.permute.xlu0 %282
    %284 = vset.pattern.permute.xlu0 2
    %285 = vperm.xlu0 %284, %v28
    %v286 = vpop.permute.xlu0 %285
    %287 = vset.pattern.permute.xlu0 2
    %288 = vperm.xlu0 %287, %v29
    %v289 = vpop.permute.xlu0 %288
    %290 = vset.pattern.permute.xlu0 2
    %291 = vperm.xlu0 %290, %v30
    %v292 = vpop.permute.xlu0 %291
    %293 = vset.pattern.permute.xlu0 2
    %294 = vperm.xlu0 %293, %v31
    %v295 = vpop.permute.xlu0 %294
    %296 = vset.pattern.permute.xlu0 2
    %297 = vperm.xlu0 %296, %v32
    %v298 = vpop.permute.xlu0 %297
    %299 = vset.pattern.permute.xlu0 2
    %300 = vperm.xlu0 %299, %v33
    %v301 = vpop.permute.xlu0 %300
    %302 = vset.pattern.permute.xlu0 2
    %303 = vperm.xlu0 %302, %v34
    %v304 = vpop.permute.xlu0 %303
    %305 = vset.pattern.permute.xlu0 2
    %306 = vperm.xlu0 %305, %v35
    %v307 = vpop.permute.xlu0 %306
    %vm308 = vcmp.eq.s32.totalorder %v256, %v37
    %vm309 = vcmp.eq.s32.totalorder %v259, %v37
    %vm310 = vcmp.eq.s32.totalorder %v262, %v37
    %vm311 = vcmp.eq.s32.totalorder %v265, %v37
    %vm312 = vcmp.eq.s32.totalorder %v268, %v37
    %vm313 = vcmp.eq.s32.totalorder %v271, %v37
    %vm314 = vcmp.eq.s32.totalorder %v274, %v37
    %vm315 = vcmp.eq.s32.totalorder %v277, %v37
    %vm316 = vcmp.eq.s32.totalorder %v280, %v37
    %vm317 = vcmp.eq.s32.totalorder %v283, %v37
    %vm318 = vcmp.eq.s32.totalorder %v286, %v37
    %vm319 = vcmp.eq.s32.totalorder %v289, %v37
    %vm320 = vcmp.eq.s32.totalorder %v292, %v37
    %vm321 = vcmp.eq.s32.totalorder %v295, %v37
    %vm322 = vcmp.eq.s32.totalorder %v298, %v37
    %vm323 = vcmp.eq.s32.totalorder %v301, %v37
    %vm324 = vcmp.eq.s32.totalorder %v304, %v37
    %vm325 = vcmp.eq.s32.totalorder %v307, %v37
    %v326 = vsel %vm308, 1, 0
    %v327 = vsel %vm309, 1, 0
    %v328 = vsel %vm310, 1, 0
    %v329 = vsel %vm311, 1, 0
    %v330 = vsel %vm312, 1, 0
    %v331 = vsel %vm313, 1, 0
    %v332 = vsel %vm314, 1, 0
    %v333 = vsel %vm315, 1, 0
    %v334 = vsel %vm316, 1, 0
    %v335 = vsel %vm317, 1, 0
    %v336 = vsel %vm318, 1, 0
    %v337 = vsel %vm319, 1, 0
    %v338 = vsel %vm320, 1, 0
    %v339 = vsel %vm321, 1, 0
    %v340 = vsel %vm322, 1, 0
    %v341 = vsel %vm323, 1, 0
    %v342 = vsel %vm324, 1, 0
    %v343 = vsel %vm325, 1, 0
    %v344 = vcvt.s32.f32 %v326
    %v345 = vcvt.s32.f32 %v327
    %v346 = vcvt.s32.f32 %v328
    %v347 = vcvt.s32.f32 %v329
    %v348 = vcvt.s32.f32 %v330
    %v349 = vcvt.s32.f32 %v331
    %v350 = vcvt.s32.f32 %v332
    %v351 = vcvt.s32.f32 %v333
    %v352 = vcvt.s32.f32 %v334
    %v353 = vcvt.s32.f32 %v335
    %v354 = vcvt.s32.f32 %v336
    %v355 = vcvt.s32.f32 %v337
    %v356 = vcvt.s32.f32 %v338
    %v357 = vcvt.s32.f32 %v339
    %v358 = vcvt.s32.f32 %v340
    %v359 = vcvt.s32.f32 %v341
    %v360 = vcvt.s32.f32 %v342
    %v361 = vcvt.s32.f32 %v343
    %v362 = vld [vmem:[%s2] sm:$0xff]
    %v363 = vld [vmem:[%s2 + $0x8] sm:$0xff]
    %v364 = vld [vmem:[%s2 + $0x10] sm:$0xff]
    %v365 = vld [vmem:[%s2 + $0x18] sm:$0xff]
    %v366 = vld [vmem:[%s2 + $0x20] sm:$0xff]
    %v367 = vld [vmem:[%s2 + $0x28] sm:$0xff]
    %v368 = vld [vmem:[%s2 + $0x30] sm:$0xff]
    %v369 = vld [vmem:[%s2 + $0x38] sm:$0xff]
    %v370 = vld [vmem:[%s2 + $0x40] sm:$0xff]
    %v371 = vld [vmem:[%s2 + $0x48] sm:$0xff]
    %v372 = vld [vmem:[%s2 + $0x50] sm:$0xff]
    %v373 = vld [vmem:[%s2 + $0x58] sm:$0xff]
    %v374 = vld [vmem:[%s2 + $0x60] sm:$0xff]
    %v375 = vld [vmem:[%s2 + $0x68] sm:$0xff]
    %v376 = vld [vmem:[%s2 + $0x70] sm:$0xff]
    %v377 = vld [vmem:[%s2 + $0x78] sm:$0xff]
    %v378 = vld [vmem:[%s2 + $0x80] sm:$0xff]
    %v379 = vld [vmem:[%s2 + $0x88] sm:$0xff]
    %v380 = vld [vmem:[%s2 + $0x90] sm:$0xff]
    %v381 = vld [vmem:[%s2 + $0x98] sm:$0xff]
    %v382 = vld [vmem:[%s2 + $0xa0] sm:$0xff]
    %v383 = vld [vmem:[%s2 + $0xa8] sm:$0xff]
    %v384 = vld [vmem:[%s2 + $0xb0] sm:$0xff]
    %v385 = vld [vmem:[%s2 + $0xb8] sm:$0xff]
    %v386 = vld [vmem:[%s2 + $0xc0] sm:$0xff]
    %v387 = vld [vmem:[%s2 + $0xc8] sm:$0xff]
    %v388 = vld [vmem:[%s2 + $0xd0] sm:$0xff]
    %v389 = vld [vmem:[%s2 + $0xd8] sm:$0xff]
    %v390 = vld [vmem:[%s2 + $0xe0] sm:$0xff]
    %v391 = vld [vmem:[%s2 + $0xe8] sm:$0xff]
    %v392 = vld [vmem:[%s2 + $0xf0] sm:$0xff]
    %v393 = vld [vmem:[%s2 + $0xf8] sm:$0xff]
    %v394 = vld [vmem:[%s2 + $0x100] sm:$0xff]
    %v395 = vld [vmem:[%s2 + $0x108] sm:$0xff]
    %v396 = vld [vmem:[%s2 + $0x110] sm:$0xff]
    %v397 = vld [vmem:[%s2 + $0x118] sm:$0xff]
    %v398 = vld [vmem:[%s2 + $0x120] sm:$0xff]
    %v399 = vld [vmem:[%s2 + $0x128] sm:$0xff]
    %v400 = vld [vmem:[%s2 + $0x130] sm:$0xff]
    %v401 = vld [vmem:[%s2 + $0x138] sm:$0xff]
    %v402 = vld [vmem:[%s2 + $0x140] sm:$0xff]
    %v403 = vld [vmem:[%s2 + $0x148] sm:$0xff]
    %v404 = vld [vmem:[%s2 + $0x150] sm:$0xff]
    %v405 = vld [vmem:[%s2 + $0x158] sm:$0xff]
    %v406 = vld [vmem:[%s2 + $0x160] sm:$0xff]
    %v407 = vld [vmem:[%s2 + $0x168] sm:$0xff]
    %v408 = vld [vmem:[%s2 + $0x170] sm:$0xff]
    %v409 = vld [vmem:[%s2 + $0x178] sm:$0xff]
    %410 = vmatprep.subr.mxu0 0.0
    %411 = vmatpush1.msra.mxu0 %v362
    %412 = vmatprep.subr.mxu0 0.0
    %413 = vmatpush1.msra.mxu0 %v363
    %414 = vmatprep.subr.mxu0 0.0
    %415 = vmatpush1.msra.mxu0 %v364
    %416 = vmatprep.subr.mxu0 0.0
    %417 = vmatpush1.msra.mxu0 %v365
    %418 = vmatprep.subr.mxu0 0.0
    %419 = vmatpush1.msra.mxu0 %v366
    %420 = vmatprep.subr.mxu0 0.0
    %421 = vmatpush1.msra.mxu0 %v367
    %422 = vmatprep.subr.mxu0 0.0
    %423 = vmatpush1.msra.mxu0 %v368
    %424 = vmatprep.subr.mxu0 0.0
    %425 = vmatpush1.msra.mxu0 %v369
    %426 = vmatprep.subr.mxu0 0.0
    %427 = vmatpush1.msra.mxu0 %v370
    %428 = vmatprep.subr.mxu0 0.0
    %429 = vmatpush1.msra.mxu0 %v371
    %430 = vmatprep.subr.mxu0 0.0
    %431 = vmatpush1.msra.mxu0 %v372
    %432 = vmatprep.subr.mxu0 0.0
    %433 = vmatpush1.msra.mxu0 %v373
    %434 = vmatprep.subr.mxu0 0.0
    %435 = vmatpush1.msra.mxu0 %v374
    %436 = vmatprep.subr.mxu0 0.0
    %437 = vmatpush1.msra.mxu0 %v375
    %438 = vmatprep.subr.mxu0 0.0
    %439 = vmatpush1.msra.mxu0 %v376
    %440 = vmatprep.subr.mxu0 0.0
    %441 = vmatpush1.msra.mxu0 %v377
    %442 = vmatprep.subr.mxu0 0.0
    %443 = vmatpush1.msra.mxu0 %v378
    %444 = vmatprep.subr.mxu0 0.0
    %445 = vmatpush1.msra.mxu0 %v379
    %446 = vmatprep.subr.mxu0 0.0
    %447 = vmatpush1.msra.mxu0 %v380
    %448 = vmatprep.subr.mxu0 0.0
    %449 = vmatpush1.msra.mxu0 %v381
    %450 = vmatprep.subr.mxu0 0.0
    %451 = vmatpush1.msra.mxu0 %v382
    %452 = vmatprep.subr.mxu0 0.0
    %453 = vmatpush1.msra.mxu0 %v383
    %454 = vmatprep.subr.mxu0 0.0
    %455 = vmatpush1.msra.mxu0 %v384
    %456 = vmatprep.subr.mxu0 0.0
    %457 = vmatpush1.msra.mxu0 %v385
    %458 = vmatprep.subr.mxu0 0.0
    %459 = vmatpush1.msra.mxu0 %v386
    %460 = vmatprep.subr.mxu0 0.0
    %461 = vmatpush1.msra.mxu0 %v387
    %462 = vmatprep.subr.mxu0 0.0
    %463 = vmatpush1.msra.mxu0 %v388
    %464 = vmatprep.subr.mxu0 0.0
    %465 = vmatpush1.msra.mxu0 %v389
    %466 = vmatprep.subr.mxu0 0.0
    %467 = vmatpush1.msra.mxu0 %v390
    %468 = vmatprep.subr.mxu0 0.0
    %469 = vmatpush1.msra.mxu0 %v391
    %470 = vmatprep.subr.mxu0 0.0
    %471 = vmatpush1.msra.mxu0 %v392
    %472 = vmatprep.subr.mxu0 0.0
    %473 = vmatpush1.msra.mxu0 %v393
    %474 = vmatprep.mubr.f32.mxu0 %v236
    %475 = vmatmul.mubr.f32.gmra.mrb[0].mxu0 %v128
    %v476 = vpop.f32.mrb[0].mxu0
    %v477 = vadd.f32 0.0, %v476
    %v478 = vpop.f32.mrb[0].mxu0
    %479 = vmatprep.mubr.f32.mxu0 %v237
    %480 = vmatmul.mubr.f32.gmra.mrb[0].mxu0 %v129
    %v481 = vpop.f32.mrb[0].mxu0
    %v482 = vadd.f32 0.0, %v481
    %v483 = vpop.f32.mrb[0].mxu0
    %484 = vmatprep.mubr.f32.mxu0 %v238
    %485 = vmatmul.mubr.f32.gmra.mrb[0].mxu0 %v130
    %v486 = vpop.f32.mrb[0].mxu0
    %v487 = vadd.f32 0.0, %v486
    %v488 = vpop.f32.mrb[0].mxu0
    %489 = vmatprep.mubr.f32.mxu0 %v239
    %490 = vmatmul.mubr.f32.gmra.mrb[0].mxu0 %v131
    %v491 = vpop.f32.mrb[0].mxu0
    %v492 = vadd.f32 0.0, %v491
    %v493 = vpop.f32.mrb[0].mxu0
    %494 = vmatprep.mubr.f32.mxu0 %v240
    %495 = vmatmul.mubr.f32.gmra.mrb[0].mxu0 %v132
    %v496 = vpop.f32.mrb[0].mxu0
    %v497 = vadd.f32 0.0, %v496
    %v498 = vpop.f32.mrb[0].mxu0
    %499 = vmatprep.mubr.f32.mxu0 %v241
    %500 = vmatmul.mubr.f32.gmra.mrb[0].mxu0 %v133
    %v501 = vpop.f32.mrb[0].mxu0
    %v502 = vadd.f32 0.0, %v501
    %v503 = vpop.f32.mrb[0].mxu0
    %504 = vmatprep.mubr.f32.mxu0 %v242
    %505 = vmatmul.mubr.f32.gmra.mrb[0].mxu0 %v134
    %v506 = vpop.f32.mrb[0].mxu0
    %v507 = vadd.f32 0.0, %v506
    %v508 = vpop.f32.mrb[0].mxu0
    %509 = vmatprep.mubr.f32.mxu0 %v243
    %510 = vmatmul.mubr.f32.gmra.mrb[0].mxu0 %v135
    %v511 = vpop.f32.mrb[0].mxu0
    %v512 = vadd.f32 0.0, %v511
    %v513 = vpop.f32.mrb[0].mxu0
    %514 = vmatprep.mubr.f32.mxu0 %v244
    %515 = vmatmul.mubr.f32.gmra.mrb[0].mxu0 %v136
    %v516 = vpop.f32.mrb[0].mxu0
    %v517 = vadd.f32 0.0, %v516
    %v518 = vpop.f32.mrb[0].mxu0
    %519 = vmatprep.mubr.f32.mxu0 %v245
    %520 = vmatmul.mubr.f32.gmra.mrb[0].mxu0 %v137
    %v521 = vpop.f32.mrb[0].mxu0
    %v522 = vadd.f32 0.0, %v521
    %v523 = vpop.f32.mrb[0].mxu0
    %524 = vmatprep.mubr.f32.mxu0 %v246
    %525 = vmatmul.mubr.f32.gmra.mrb[0].mxu0 %v138
    %v526 = vpop.f32.mrb[0].mxu0
    %v527 = vadd.f32 0.0, %v526
    %v528 = vpop.f32.mrb[0].mxu0
    %529 = vmatprep.mubr.f32.mxu0 %v247
    %530 = vmatmul.mubr.f32.gmra.mrb[0].mxu0 %v139
    %v531 = vpop.f32.mrb[0].mxu0
    %v532 = vadd.f32 0.0, %v531
    %v533 = vpop.f32.mrb[0].mxu0
    %534 = vmatprep.mubr.f32.mxu0 %v248
    %535 = vmatmul.mubr.f32.gmra.mrb[0].mxu0 %v140
    %v536 = vpop.f32.mrb[0].mxu0
    %v537 = vadd.f32 0.0, %v536
    %v538 = vpop.f32.mrb[0].mxu0
    %539 = vmatprep.mubr.f32.mxu0 %v249
    %540 = vmatmul.mubr.f32.gmra.mrb[0].mxu0 %v141
    %v541 = vpop.f32.mrb[0].mxu0
    %v542 = vadd.f32 0.0, %v541
    %v543 = vpop.f32.mrb[0].mxu0
    %544 = vmatprep.mubr.f32.mxu0 %v250
    %545 = vmatmul.mubr.f32.gmra.mrb[0].mxu0 %v142
    %v546 = vpop.f32.mrb[0].mxu0
    %v547 = vadd.f32 0.0, %v546
    %v548 = vpop.f32.mrb[0].mxu0
    %549 = vmatprep.mubr.f32.mxu0 %v251
    %550 = vmatmul.mubr.f32.gmra.mrb[0].mxu0 %v143
    %v551 = vpop.f32.mrb[0].mxu0
    %v552 = vadd.f32 0.0, %v551
    %v553 = vpop.f32.mrb[0].mxu0
    %554 = vmatprep.mubr.f32.mxu0 %v252
    %555 = vmatmul.mubr.f32.gmra.mrb[0].mxu0 %v144
    %v556 = vpop.f32.mrb[0].mxu0
    %v557 = vadd.f32 0.0, %v556
    %v558 = vpop.f32.mrb[0].mxu0
    %559 = vmatprep.mubr.f32.mxu0 %v253
    %560 = vmatmul.mubr.f32.gmra.mrb[0].mxu0 %v145
    %v561 = vpop.f32.mrb[0].mxu0
    %v562 = vadd.f32 0.0, %v561
    %v563 = vpop.f32.mrb[0].mxu0
    %564 = vdwg.mxu0
    %565 = vmatprep.subr.mxu0 0.0
    %566 = vmatpush1.msra.mxu0 %v394
    %567 = vmatprep.subr.mxu0 0.0
    %568 = vmatpush1.msra.mxu0 %v395
    %569 = vmatprep.subr.mxu0 0.0
    %570 = vmatpush1.msra.mxu0 %v396
    %571 = vmatprep.subr.mxu0 0.0
    %572 = vmatpush1.msra.mxu0 %v397
    %573 = vmatprep.subr.mxu0 0.0
    %574 = vmatpush1.msra.mxu0 %v398
    %575 = vmatprep.subr.mxu0 0.0
    %576 = vmatpush1.msra.mxu0 %v399
    %577 = vmatprep.subr.mxu0 0.0
    %578 = vmatpush1.msra.mxu0 %v400
    %579 = vmatprep.subr.mxu0 0.0
    %580 = vmatpush1.msra.mxu0 %v401
    %581 = vmatprep.subr.mxu0 0.0
    %582 = vmatpush1.msra.mxu0 %v402
    %583 = vmatprep.subr.mxu0 0.0
    %584 = vmatpush1.msra.mxu0 %v403
    %585 = vmatprep.subr.mxu0 0.0
    %586 = vmatpush1.msra.mxu0 %v404
    %587 = vmatprep.subr.mxu0 0.0
    %588 = vmatpush1.msra.mxu0 %v405
    %589 = vmatprep.subr.mxu0 0.0
    %590 = vmatpush1.msra.mxu0 %v406
    %591 = vmatprep.subr.mxu0 0.0
    %592 = vmatpush1.msra.mxu0 %v407
    %593 = vmatprep.subr.mxu0 0.0
    %594 = vmatpush1.msra.mxu0 %v408
    %595 = vmatprep.subr.mxu0 0.0
    %596 = vmatpush1.msra.mxu0 %v409
    %597 = vmatprep.subr.mxu0 0.0
    %598 = vmatpush1.msra.mxu0 0.0
    %599 = vmatprep.subr.mxu0 0.0
    %600 = vmatpush1.msra.mxu0 0.0
    %601 = vmatprep.subr.mxu0 0.0
    %602 = vmatpush1.msra.mxu0 0.0
    %603 = vmatprep.subr.mxu0 0.0
    %604 = vmatpush1.msra.mxu0 0.0
    %605 = vmatprep.subr.mxu0 0.0
    %606 = vmatpush1.msra.mxu0 0.0
    %607 = vmatprep.subr.mxu0 0.0
    %608 = vmatpush1.msra.mxu0 0.0
    %609 = vmatprep.subr.mxu0 0.0
    %610 = vmatpush1.msra.mxu0 0.0
    %611 = vmatprep.subr.mxu0 0.0
    %612 = vmatpush1.msra.mxu0 0.0
    %613 = vmatprep.subr.mxu0 0.0
    %614 = vmatpush1.msra.mxu0 0.0
    %615 = vmatprep.subr.mxu0 0.0
    %616 = vmatpush1.msra.mxu0 0.0
    %617 = vmatprep.subr.mxu0 0.0
    %618 = vmatpush1.msra.mxu0 0.0
    %619 = vmatprep.subr.mxu0 0.0
    %620 = vmatpush1.msra.mxu0 0.0
    %621 = vmatprep.subr.mxu0 0.0
    %622 = vmatpush1.msra.mxu0 0.0
    %623 = vmatprep.subr.mxu0 0.0
    %624 = vmatpush1.msra.mxu0 0.0
    %625 = vmatprep.subr.mxu0 0.0
    %626 = vmatpush1.msra.mxu0 0.0
    %627 = vmatprep.subr.mxu0 0.0
    %628 = vmatpush1.msra.mxu0 0.0
    %629 = vmatprep.mubr.f32.mxu0 0.0
    %630 = vmatmul.mubr.f32.gmra.mrb[0].mxu0 %v344
    %v631 = vpop.f32.mrb[0].mxu0
    %v632 = vadd.f32 %v477, %v631
    %v633 = vpop.f32.mrb[0].mxu0
    %634 = vmatprep.mubr.f32.mxu0 0.0
    %635 = vmatmul.mubr.f32.gmra.mrb[0].mxu0 %v345
    %v636 = vpop.f32.mrb[0].mxu0
    %v637 = vadd.f32 %v482, %v636
    %v638 = vpop.f32.mrb[0].mxu0
    %639 = vmatprep.mubr.f32.mxu0 0.0
    %640 = vmatmul.mubr.f32.gmra.mrb[0].mxu0 %v346
    %v641 = vpop.f32.mrb[0].mxu0
    %v642 = vadd.f32 %v487, %v641
    %v643 = vpop.f32.mrb[0].mxu0
    %644 = vmatprep.mubr.f32.mxu0 0.0
    %645 = vmatmul.mubr.f32.gmra.mrb[0].mxu0 %v347
    %v646 = vpop.f32.mrb[0].mxu0
    %v647 = vadd.f32 %v492, %v646
    %v648 = vpop.f32.mrb[0].mxu0
    %649 = vmatprep.mubr.f32.mxu0 0.0
    %650 = vmatmul.mubr.f32.gmra.mrb[0].mxu0 %v348
    %v651 = vpop.f32.mrb[0].mxu0
    %v652 = vadd.f32 %v497, %v651
    %v653 = vpop.f32.mrb[0].mxu0
    %654 = vmatprep.mubr.f32.mxu0 0.0
    %655 = vmatmul.mubr.f32.gmra.mrb[0].mxu0 %v349
    %v656 = vpop.f32.mrb[0].mxu0
    %v657 = vadd.f32 %v502, %v656
    %v658 = vpop.f32.mrb[0].mxu0
    %659 = vmatprep.mubr.f32.mxu0 0.0
    %660 = vmatmul.mubr.f32.gmra.mrb[0].mxu0 %v350
    %v661 = vpop.f32.mrb[0].mxu0
    %v662 = vadd.f32 %v507, %v661
    %v663 = vpop.f32.mrb[0].mxu0
    %664 = vmatprep.mubr.f32.mxu0 0.0
    %665 = vmatmul.mubr.f32.gmra.mrb[0].mxu0 %v351
    %v666 = vpop.f32.mrb[0].mxu0
    %v667 = vadd.f32 %v512, %v666
    %v668 = vpop.f32.mrb[0].mxu0
    %669 = vmatprep.mubr.f32.mxu0 0.0
    %670 = vmatmul.mubr.f32.gmra.mrb[0].mxu0 %v352
    %v671 = vpop.f32.mrb[0].mxu0
    %v672 = vadd.f32 %v517, %v671
    %v673 = vpop.f32.mrb[0].mxu0
    %674 = vmatprep.mubr.f32.mxu0 0.0
    %675 = vmatmul.mubr.f32.gmra.mrb[0].mxu0 %v353
    %v676 = vpop.f32.mrb[0].mxu0
    %v677 = vadd.f32 %v522, %v676
    %v678 = vpop.f32.mrb[0].mxu0
    %679 = vmatprep.mubr.f32.mxu0 0.0
    %680 = vmatmul.mubr.f32.gmra.mrb[0].mxu0 %v354
    %v681 = vpop.f32.mrb[0].mxu0
    %v682 = vadd.f32 %v527, %v681
    %v683 = vpop.f32.mrb[0].mxu0
    %684 = vmatprep.mubr.f32.mxu0 0.0
    %685 = vmatmul.mubr.f32.gmra.mrb[0].mxu0 %v355
    %v686 = vpop.f32.mrb[0].mxu0
    %v687 = vadd.f32 %v532, %v686
    %v688 = vpop.f32.mrb[0].mxu0
    %689 = vmatprep.mubr.f32.mxu0 0.0
    %690 = vmatmul.mubr.f32.gmra.mrb[0].mxu0 %v356
    %v691 = vpop.f32.mrb[0].mxu0
    %v692 = vadd.f32 %v537, %v691
    %v693 = vpop.f32.mrb[0].mxu0
    %694 = vmatprep.mubr.f32.mxu0 0.0
    %695 = vmatmul.mubr.f32.gmra.mrb[0].mxu0 %v357
    %v696 = vpop.f32.mrb[0].mxu0
    %v697 = vadd.f32 %v542, %v696
    %v698 = vpop.f32.mrb[0].mxu0
    %699 = vmatprep.mubr.f32.mxu0 0.0
    %700 = vmatmul.mubr.f32.gmra.mrb[0].mxu0 %v358
    %v701 = vpop.f32.mrb[0].mxu0
    %v702 = vadd.f32 %v547, %v701
    %v703 = vpop.f32.mrb[0].mxu0
    %704 = vmatprep.mubr.f32.mxu0 0.0
    %705 = vmatmul.mubr.f32.gmra.mrb[0].mxu0 %v359
    %v706 = vpop.f32.mrb[0].mxu0
    %v707 = vadd.f32 %v552, %v706
    %v708 = vpop.f32.mrb[0].mxu0
    %709 = vmatprep.mubr.f32.mxu0 0.0
    %710 = vmatmul.mubr.f32.gmra.mrb[0].mxu0 %v360
    %v711 = vpop.f32.mrb[0].mxu0
    %v712 = vadd.f32 %v557, %v711
    %v713 = vpop.f32.mrb[0].mxu0
    %714 = vmatprep.mubr.f32.mxu0 0.0
    %715 = vmatmul.mubr.f32.gmra.mrb[0].mxu0 %v361
    %v716 = vpop.f32.mrb[0].mxu0
    %v717 = vadd.f32 %v562, %v716
    %v718 = vpop.f32.mrb[0].mxu0
    %719 = vdwg.mxu0
    %vm720 = vcmask 195584
    %v721 = vsel %vm720, %v632, -inf
    %v722 = vrot.slane %v721, 4
    %v723 = vmax.f32 %v721, %v722
    %v724 = vrot.slane %v723, 2
    %v725 = vmax.f32 %v723, %v724
    %v726 = vrot.slane %v725, 1
    %v727 = vmax.f32 %v725, %v726
    %v728 = vsel %vm720, %v637, -inf
    %v729 = vrot.slane %v728, 4
    %v730 = vmax.f32 %v728, %v729
    %v731 = vrot.slane %v730, 2
    %v732 = vmax.f32 %v730, %v731
    %v733 = vrot.slane %v732, 1
    %v734 = vmax.f32 %v732, %v733
    %v735 = vsel %vm720, %v642, -inf
    %v736 = vrot.slane %v735, 4
    %v737 = vmax.f32 %v735, %v736
    %v738 = vrot.slane %v737, 2
    %v739 = vmax.f32 %v737, %v738
    %v740 = vrot.slane %v739, 1
    %v741 = vmax.f32 %v739, %v740
    %v742 = vsel %vm720, %v647, -inf
    %v743 = vrot.slane %v742, 4
    %v744 = vmax.f32 %v742, %v743
    %v745 = vrot.slane %v744, 2
    %v746 = vmax.f32 %v744, %v745
    %v747 = vrot.slane %v746, 1
    %v748 = vmax.f32 %v746, %v747
    %v749 = vsel %vm720, %v652, -inf
    %v750 = vrot.slane %v749, 4
    %v751 = vmax.f32 %v749, %v750
    %v752 = vrot.slane %v751, 2
    %v753 = vmax.f32 %v751, %v752
    %v754 = vrot.slane %v753, 1
    %v755 = vmax.f32 %v753, %v754
    %v756 = vsel %vm720, %v657, -inf
    %v757 = vrot.slane %v756, 4
    %v758 = vmax.f32 %v756, %v757
    %v759 = vrot.slane %v758, 2
    %v760 = vmax.f32 %v758, %v759
    %v761 = vrot.slane %v760, 1
    %v762 = vmax.f32 %v760, %v761
    %v763 = vsel %vm720, %v662, -inf
    %v764 = vrot.slane %v763, 4
    %v765 = vmax.f32 %v763, %v764
    %v766 = vrot.slane %v765, 2
    %v767 = vmax.f32 %v765, %v766
    %v768 = vrot.slane %v767, 1
    %v769 = vmax.f32 %v767, %v768
    %v770 = vsel %vm720, %v667, -inf
    %v771 = vrot.slane %v770, 4
    %v772 = vmax.f32 %v770, %v771
    %v773 = vrot.slane %v772, 2
    %v774 = vmax.f32 %v772, %v773
    %v775 = vrot.slane %v774, 1
    %v776 = vmax.f32 %v774, %v775
    %v777 = vsel %vm720, %v672, -inf
    %v778 = vrot.slane %v777, 4
    %v779 = vmax.f32 %v777, %v778
    %v780 = vrot.slane %v779, 2
    %v781 = vmax.f32 %v779, %v780
    %v782 = vrot.slane %v781, 1
    %v783 = vmax.f32 %v781, %v782
    %v784 = vsel %vm720, %v677, -inf
    %v785 = vrot.slane %v784, 4
    %v786 = vmax.f32 %v784, %v785
    %v787 = vrot.slane %v786, 2
    %v788 = vmax.f32 %v786, %v787
    %v789 = vrot.slane %v788, 1
    %v790 = vmax.f32 %v788, %v789
    %v791 = vsel %vm720, %v682, -inf
    %v792 = vrot.slane %v791, 4
    %v793 = vmax.f32 %v791, %v792
    %v794 = vrot.slane %v793, 2
    %v795 = vmax.f32 %v793, %v794
    %v796 = vrot.slane %v795, 1
    %v797 = vmax.f32 %v795, %v796
    %v798 = vsel %vm720, %v687, -inf
    %v799 = vrot.slane %v798, 4
    %v800 = vmax.f32 %v798, %v799
    %v801 = vrot.slane %v800, 2
    %v802 = vmax.f32 %v800, %v801
    %v803 = vrot.slane %v802, 1
    %v804 = vmax.f32 %v802, %v803
    %v805 = vsel %vm720, %v692, -inf
    %v806 = vrot.slane %v805, 4
    %v807 = vmax.f32 %v805, %v806
    %v808 = vrot.slane %v807, 2
    %v809 = vmax.f32 %v807, %v808
    %v810 = vrot.slane %v809, 1
    %v811 = vmax.f32 %v809, %v810
    %v812 = vsel %vm720, %v697, -inf
    %v813 = vrot.slane %v812, 4
    %v814 = vmax.f32 %v812, %v813
    %v815 = vrot.slane %v814, 2
    %v816 = vmax.f32 %v814, %v815
    %v817 = vrot.slane %v816, 1
    %v818 = vmax.f32 %v816, %v817
    %v819 = vsel %vm720, %v702, -inf
    %v820 = vrot.slane %v819, 4
    %v821 = vmax.f32 %v819, %v820
    %v822 = vrot.slane %v821, 2
    %v823 = vmax.f32 %v821, %v822
    %v824 = vrot.slane %v823, 1
    %v825 = vmax.f32 %v823, %v824
    %v826 = vsel %vm720, %v707, -inf
    %v827 = vrot.slane %v826, 4
    %v828 = vmax.f32 %v826, %v827
    %v829 = vrot.slane %v828, 2
    %v830 = vmax.f32 %v828, %v829
    %v831 = vrot.slane %v830, 1
    %v832 = vmax.f32 %v830, %v831
    %v833 = vld [vmem:[%s2 + $0x220] sm:$0x1]
    %v834 = vlaneseq
    %v835 = vshrl.u32 %v834, 7
    %v836 = vsub.s32 0, %v835
    %v837 = vrot.slane %v833, %v836
    %v838 = vadd.f32 %v727, %v837
    %v839 = vadd.f32 %v734, %v837
    %v840 = vadd.f32 %v741, %v837
    %v841 = vadd.f32 %v748, %v837
    %v842 = vadd.f32 %v755, %v837
    %v843 = vadd.f32 %v762, %v837
    %v844 = vadd.f32 %v769, %v837
    %v845 = vadd.f32 %v776, %v837
    %v846 = vadd.f32 %v783, %v837
    %v847 = vadd.f32 %v790, %v837
    %v848 = vadd.f32 %v797, %v837
    %v849 = vadd.f32 %v804, %v837
    %v850 = vadd.f32 %v811, %v837
    %v851 = vadd.f32 %v818, %v837
    %v852 = vadd.f32 %v825, %v837
    %v853 = vadd.f32 %v832, %v837
    %v854 = vld [vmem:[%s2 + $0x180] sm:$0xff]
    %v855 = vld [vmem:[%s2 + $0x188] sm:$0xff]
    %v856 = vld [vmem:[%s2 + $0x190] sm:$0xff]
    %v857 = vld [vmem:[%s2 + $0x221] sm:$0x1]
    %v858 = vlaneseq
    %v859 = vshrl.u32 %v858, 7
    %v860 = vsub.s32 0, %v859
    %v861 = vrot.slane %v857, %v860
    %v878 = vrot.slane %v839, 7
    %vm879 = vcmask 1041409
    %v880 = vsel %vm879, %v878, %v838
    %v881 = vrot.slane %v840, 6
    %vm882 = vcmask 1042434
    %v883 = vsel %vm882, %v881, %v880
    %v884 = vrot.slane %v841, 5
    %vm885 = vcmask 1043459
    %v886 = vsel %vm885, %v884, %v883
    %v887 = vrot.slane %v842, 4
    %vm888 = vcmask 1044484
    %v889 = vsel %vm888, %v887, %v886
    %v890 = vrot.slane %v843, 3
    %vm891 = vcmask 1045509
    %v892 = vsel %vm891, %v890, %v889
    %v893 = vrot.slane %v844, 2
    %vm894 = vcmask 1046534
    %v895 = vsel %vm894, %v893, %v892
    %v896 = vrot.slane %v845, 1
    %vm897 = vcmask 1047559
    %v898 = vsel %vm897, %v896, %v895
    %v899 = vrot.slane %v847, 7
    %v900 = vsel %vm879, %v899, %v846
    %v901 = vrot.slane %v848, 6
    %v902 = vsel %vm882, %v901, %v900
    %v903 = vrot.slane %v849, 5
    %v904 = vsel %vm885, %v903, %v902
    %v905 = vrot.slane %v850, 4
    %v906 = vsel %vm888, %v905, %v904
    %v907 = vrot.slane %v851, 3
    %v908 = vsel %vm891, %v907, %v906
    %v909 = vrot.slane %v852, 2
    %v910 = vsel %vm894, %v909, %v908
    %v911 = vrot.slane %v853, 1
    %v912 = vsel %vm897, %v911, %v910
    %v913 = vsel %vm720, %v898, 0
    %v915 = vsel %vm720, %v912, 0
    %917 = vmatprep.subr.mxu0 0.0
    %918 = vmatpush1.msra.mxu0 %v854
    %919 = vmatprep.subr.mxu0 0.0
    %920 = vmatpush1.msra.mxu0 %v855
    %921 = vmatprep.subr.mxu0 0.0
    %922 = vmatpush1.msra.mxu0 %v856
    %923 = vmatprep.subr.mxu0 0.0
    %924 = vmatpush1.msra.mxu0 0.0
    %925 = vmatprep.subr.mxu0 0.0
    %926 = vmatpush1.msra.mxu0 0.0
    %927 = vmatprep.subr.mxu0 0.0
    %928 = vmatpush1.msra.mxu0 0.0
    %929 = vmatprep.subr.mxu0 0.0
    %930 = vmatpush1.msra.mxu0 0.0
    %931 = vmatprep.subr.mxu0 0.0
    %932 = vmatpush1.msra.mxu0 0.0
    %933 = vmatprep.subr.mxu0 0.0
    %934 = vmatpush1.msra.mxu0 0.0
    %935 = vmatprep.subr.mxu0 0.0
    %936 = vmatpush1.msra.mxu0 0.0
    %937 = vmatprep.subr.mxu0 0.0
    %938 = vmatpush1.msra.mxu0 0.0
    %939 = vmatprep.subr.mxu0 0.0
    %940 = vmatpush1.msra.mxu0 0.0
    %941 = vmatprep.subr.mxu0 0.0
    %942 = vmatpush1.msra.mxu0 0.0
    %943 = vmatprep.subr.mxu0 0.0
    %944 = vmatpush1.msra.mxu0 0.0
    %945 = vmatprep.subr.mxu0 0.0
    %946 = vmatpush1.msra.mxu0 0.0
    %947 = vmatprep.subr.mxu0 0.0
    %948 = vmatpush1.msra.mxu0 0.0
    %949 = vmatprep.subr.mxu0 0.0
    %950 = vmatpush1.msra.mxu0 0.0
    %951 = vmatprep.subr.mxu0 0.0
    %952 = vmatpush1.msra.mxu0 0.0
    %953 = vmatprep.subr.mxu0 0.0
    %954 = vmatpush1.msra.mxu0 0.0
    %955 = vmatprep.subr.mxu0 0.0
    %956 = vmatpush1.msra.mxu0 0.0
    %957 = vmatprep.subr.mxu0 0.0
    %958 = vmatpush1.msra.mxu0 0.0
    %959 = vmatprep.subr.mxu0 0.0
    %960 = vmatpush1.msra.mxu0 0.0
    %961 = vmatprep.subr.mxu0 0.0
    %962 = vmatpush1.msra.mxu0 0.0
    %963 = vmatprep.subr.mxu0 0.0
    %964 = vmatpush1.msra.mxu0 0.0
    %965 = vmatprep.subr.mxu0 0.0
    %966 = vmatpush1.msra.mxu0 0.0
    %967 = vmatprep.subr.mxu0 0.0
    %968 = vmatpush1.msra.mxu0 0.0
    %969 = vmatprep.subr.mxu0 0.0
    %970 = vmatpush1.msra.mxu0 0.0
    %971 = vmatprep.subr.mxu0 0.0
    %972 = vmatpush1.msra.mxu0 0.0
    %973 = vmatprep.subr.mxu0 0.0
    %974 = vmatpush1.msra.mxu0 0.0
    %975 = vmatprep.subr.mxu0 0.0
    %976 = vmatpush1.msra.mxu0 0.0
    %977 = vmatprep.subr.mxu0 0.0
    %978 = vmatpush1.msra.mxu0 0.0
    %979 = vmatprep.subr.mxu0 0.0
    %980 = vmatpush1.msra.mxu0 0.0
    %981 = vmatprep.mubr.f32.mxu0 0.0
    %982 = vmatmul.mubr.f32.gmra.mrb[0].mxu0 %v913
    %v983 = vpop.f32.mrb[0].mxu0
    %v984 = vadd.f32 %v861, %v983
    %v985 = vpop.f32.mrb[0].mxu0
    %986 = vmatprep.mubr.f32.mxu0 0.0
    %987 = vmatmul.mubr.f32.gmra.mrb[0].mxu0 %v915
    %v988 = vpop.f32.mrb[0].mxu0
    %v989 = vadd.f32 %v861, %v988
    %v990 = vpop.f32.mrb[0].mxu0
    %991 = vdwg.mxu0
    %v992 = vtanh.pop %v984
    %v993 = vtanh.pop %v989
    %v994 = vld [vmem:[%s2 + $0x198] sm:$0xff]
    %vm995 = vcmask 64512
    %v997 = vsel %vm995, %v992, 0
    %v1000 = vsel %vm995, %v993, 0
    %1002 = vmatprep.subr.mxu0 0.0
    %1003 = vmatpush1.msra.mxu0 %v994
    %1004 = vmatprep.subr.mxu0 0.0
    %1005 = vmatpush1.msra.mxu0 0.0
    %1006 = vmatprep.subr.mxu0 0.0
    %1007 = vmatpush1.msra.mxu0 0.0
    %1008 = vmatprep.subr.mxu0 0.0
    %1009 = vmatpush1.msra.mxu0 0.0
    %1010 = vmatprep.subr.mxu0 0.0
    %1011 = vmatpush1.msra.mxu0 0.0
    %1012 = vmatprep.subr.mxu0 0.0
    %1013 = vmatpush1.msra.mxu0 0.0
    %1014 = vmatprep.subr.mxu0 0.0
    %1015 = vmatpush1.msra.mxu0 0.0
    %1016 = vmatprep.subr.mxu0 0.0
    %1017 = vmatpush1.msra.mxu0 0.0
    %1018 = vmatprep.subr.mxu0 0.0
    %1019 = vmatpush1.msra.mxu0 0.0
    %1020 = vmatprep.subr.mxu0 0.0
    %1021 = vmatpush1.msra.mxu0 0.0
    %1022 = vmatprep.subr.mxu0 0.0
    %1023 = vmatpush1.msra.mxu0 0.0
    %1024 = vmatprep.subr.mxu0 0.0
    %1025 = vmatpush1.msra.mxu0 0.0
    %1026 = vmatprep.subr.mxu0 0.0
    %1027 = vmatpush1.msra.mxu0 0.0
    %1028 = vmatprep.subr.mxu0 0.0
    %1029 = vmatpush1.msra.mxu0 0.0
    %1030 = vmatprep.subr.mxu0 0.0
    %1031 = vmatpush1.msra.mxu0 0.0
    %1032 = vmatprep.subr.mxu0 0.0
    %1033 = vmatpush1.msra.mxu0 0.0
    %1034 = vmatprep.subr.mxu0 0.0
    %1035 = vmatpush1.msra.mxu0 0.0
    %1036 = vmatprep.subr.mxu0 0.0
    %1037 = vmatpush1.msra.mxu0 0.0
    %1038 = vmatprep.subr.mxu0 0.0
    %1039 = vmatpush1.msra.mxu0 0.0
    %1040 = vmatprep.subr.mxu0 0.0
    %1041 = vmatpush1.msra.mxu0 0.0
    %1042 = vmatprep.subr.mxu0 0.0
    %1043 = vmatpush1.msra.mxu0 0.0
    %1044 = vmatprep.subr.mxu0 0.0
    %1045 = vmatpush1.msra.mxu0 0.0
    %1046 = vmatprep.subr.mxu0 0.0
    %1047 = vmatpush1.msra.mxu0 0.0
    %1048 = vmatprep.subr.mxu0 0.0
    %1049 = vmatpush1.msra.mxu0 0.0
    %1050 = vmatprep.subr.mxu0 0.0
    %1051 = vmatpush1.msra.mxu0 0.0
    %1052 = vmatprep.subr.mxu0 0.0
    %1053 = vmatpush1.msra.mxu0 0.0
    %1054 = vmatprep.subr.mxu0 0.0
    %1055 = vmatpush1.msra.mxu0 0.0
    %1056 = vmatprep.subr.mxu0 0.0
    %1057 = vmatpush1.msra.mxu0 0.0
    %1058 = vmatprep.subr.mxu0 0.0
    %1059 = vmatpush1.msra.mxu0 0.0
    %1060 = vmatprep.subr.mxu0 0.0
    %1061 = vmatpush1.msra.mxu0 0.0
    %1062 = vmatprep.subr.mxu0 0.0
    %1063 = vmatpush1.msra.mxu0 0.0
    %1064 = vmatprep.subr.mxu0 0.0
    %1065 = vmatpush1.msra.mxu0 0.0
    %1066 = vmatprep.mubr.f32.mxu0 0.0
    %1067 = vmatmul.mubr.f32.gmra.mrb[0].mxu0 %v997
    %v1068 = vpop.f32.mrb[0].mxu0
    %v1069 = vadd.f32 0.0, %v1068
    %v1070 = vpop.f32.mrb[0].mxu0
    %1071 = vmatprep.mubr.f32.mxu0 0.0
    %1072 = vmatmul.mubr.f32.gmra.mrb[0].mxu0 %v1000
    %v1073 = vpop.f32.mrb[0].mxu0
    %v1074 = vadd.f32 0.0, %v1073
    %v1075 = vpop.f32.mrb[0].mxu0
    %1076 = vdwg.mxu0
    %1079 = vrot.lane.b32.xlu0 %v1069, 32
    %v1080 = vpop.permute.xlu0 %1079
    %1081 = vrot.lane.b32.xlu0 %v1074, 32
    %v1082 = vpop.permute.xlu0 %1081
    %v1085 = vadd.f32 %v712, %v1080
    %v1086 = vadd.f32 %v717, %v1082
    %v1087 = vld [vmem:[%s2 + $0x222] sm:$0x1]
    %v1088 = vlaneseq
    %v1089 = vshrl.u32 %v1088, 7
    %v1090 = vsub.s32 0, %v1089
    %v1091 = vrot.slane %v1087, %v1090
    %1093 = vrot.lane.b32.xlu0 %v1091, 32
    %v1094 = vpop.permute.xlu0 %1093
    %v1096 = vadd.f32 %v1085, %v1094
    %v1097 = vadd.f32 %v1086, %v1094
    %v1098 = vld [vmem:[%s2 + $0x1a0] sm:$0xff]
    %v1099 = vld [vmem:[%s2 + $0x1a8] sm:$0xff]
    %v1100 = vld [vmem:[%s2 + $0x1b0] sm:$0xff]
    %v1101 = vld [vmem:[%s2 + $0x1b8] sm:$0xff]
    %v1102 = vld [vmem:[%s2 + $0x1c0] sm:$0xff]
    %v1103 = vld [vmem:[%s2 + $0x1c8] sm:$0xff]
    %v1104 = vld [vmem:[%s2 + $0x1d0] sm:$0xff]
    %v1105 = vld [vmem:[%s2 + $0x1d8] sm:$0xff]
    %v1106 = vld [vmem:[%s2 + $0x1e0] sm:$0xff]
    %v1107 = vld [vmem:[%s2 + $0x1e8] sm:$0xff]
    %v1108 = vld [vmem:[%s2 + $0x1f0] sm:$0xff]
    %v1109 = vld [vmem:[%s2 + $0x1f8] sm:$0xff]
    %v1110 = vld [vmem:[%s2 + $0x223] sm:$0x1]
    %v1111 = vlaneseq
    %v1112 = vshrl.u32 %v1111, 7
    %v1113 = vsub.s32 0, %v1112
    %v1114 = vrot.slane %v1110, %v1113
    %v1115 = vld [vmem:[%s1] sm:$0x3]
    %s1116 = scalar_lea.vmem %s1, 2
    %v1117 = vld [vmem:[%s1116] sm:$0x3]
    %vm1118 = vcmask 261120
    %v1120 = vsel %vm1118, %v1115, 0
    %1122 = vmatprep.subr.mxu0 0.0
    %1123 = vmatpush1.msra.mxu0 %v1098
    %1124 = vmatprep.subr.mxu0 0.0
    %1125 = vmatpush1.msra.mxu0 %v1099
    %1126 = vmatprep.subr.mxu0 0.0
    %1127 = vmatpush1.msra.mxu0 %v1100
    %1128 = vmatprep.subr.mxu0 0.0
    %1129 = vmatpush1.msra.mxu0 %v1101
    %1130 = vmatprep.subr.mxu0 0.0
    %1131 = vmatpush1.msra.mxu0 0.0
    %1132 = vmatprep.subr.mxu0 0.0
    %1133 = vmatpush1.msra.mxu0 0.0
    %1134 = vmatprep.subr.mxu0 0.0
    %1135 = vmatpush1.msra.mxu0 0.0
    %1136 = vmatprep.subr.mxu0 0.0
    %1137 = vmatpush1.msra.mxu0 0.0
    %1138 = vmatprep.subr.mxu0 0.0
    %1139 = vmatpush1.msra.mxu0 0.0
    %1140 = vmatprep.subr.mxu0 0.0
    %1141 = vmatpush1.msra.mxu0 0.0
    %1142 = vmatprep.subr.mxu0 0.0
    %1143 = vmatpush1.msra.mxu0 0.0
    %1144 = vmatprep.subr.mxu0 0.0
    %1145 = vmatpush1.msra.mxu0 0.0
    %1146 = vmatprep.subr.mxu0 0.0
    %1147 = vmatpush1.msra.mxu0 0.0
    %1148 = vmatprep.subr.mxu0 0.0
    %1149 = vmatpush1.msra.mxu0 0.0
    %1150 = vmatprep.subr.mxu0 0.0
    %1151 = vmatpush1.msra.mxu0 0.0
    %1152 = vmatprep.subr.mxu0 0.0
    %1153 = vmatpush1.msra.mxu0 0.0
    %1154 = vmatprep.subr.mxu0 0.0
    %1155 = vmatpush1.msra.mxu0 0.0
    %1156 = vmatprep.subr.mxu0 0.0
    %1157 = vmatpush1.msra.mxu0 0.0
    %1158 = vmatprep.subr.mxu0 0.0
    %1159 = vmatpush1.msra.mxu0 0.0
    %1160 = vmatprep.subr.mxu0 0.0
    %1161 = vmatpush1.msra.mxu0 0.0
    %1162 = vmatprep.subr.mxu0 0.0
    %1163 = vmatpush1.msra.mxu0 0.0
    %1164 = vmatprep.subr.mxu0 0.0
    %1165 = vmatpush1.msra.mxu0 0.0
    %1166 = vmatprep.subr.mxu0 0.0
    %1167 = vmatpush1.msra.mxu0 0.0
    %1168 = vmatprep.subr.mxu0 0.0
    %1169 = vmatpush1.msra.mxu0 0.0
    %1170 = vmatprep.subr.mxu0 0.0
    %1171 = vmatpush1.msra.mxu0 0.0
    %1172 = vmatprep.subr.mxu0 0.0
    %1173 = vmatpush1.msra.mxu0 0.0
    %1174 = vmatprep.subr.mxu0 0.0
    %1175 = vmatpush1.msra.mxu0 0.0
    %1176 = vmatprep.subr.mxu0 0.0
    %1177 = vmatpush1.msra.mxu0 0.0
    %1178 = vmatprep.subr.mxu0 0.0
    %1179 = vmatpush1.msra.mxu0 0.0
    %1180 = vmatprep.subr.mxu0 0.0
    %1181 = vmatpush1.msra.mxu0 0.0
    %1182 = vmatprep.subr.mxu0 0.0
    %1183 = vmatpush1.msra.mxu0 0.0
    %1184 = vmatprep.subr.mxu0 0.0
    %1185 = vmatpush1.msra.mxu0 0.0
    %1186 = vmatprep.mubr.f32.mxu0 0.0
    %1187 = vmatmul.mubr.f32.gmra.mrb[0].mxu0 %v1120
    %v1188 = vpop.f32.mrb[0].mxu0
    %v1189 = vadd.f32 0.0, %v1188
    %v1190 = vpop.f32.mrb[0].mxu0
    %1191 = vdwg.mxu0
    %1193 = vrot.lane.b32.xlu0 %v1189, 32
    %v1194 = vpop.permute.xlu0 %1193
    %v1196 = vadd.f32 %v1096, %v1194
    %v1197 = vtanh.pop %v1196
    %1199 = vrot.lane.b32.xlu0 %v1197, 96
    %v1200 = vpop.permute.xlu0 %1199
    %1203 = vrot.lane.b32.xlu0 %v1117, 32
    %v1204 = vpop.permute.xlu0 %1203
    %v1206 = vsel %vm1118, %v1200, %v1204
    %vm1207 = vcmask 523264
    %v1209 = vsel %vm1207, %v1206, 0
    %1211 = vmatprep.subr.mxu0 0.0
    %1212 = vmatpush1.msra.mxu0 %v1102
    %1213 = vmatprep.subr.mxu0 0.0
    %1214 = vmatpush1.msra.mxu0 %v1103
    %1215 = vmatprep.subr.mxu0 0.0
    %1216 = vmatpush1.msra.mxu0 %v1104
    %1217 = vmatprep.subr.mxu0 0.0
    %1218 = vmatpush1.msra.mxu0 %v1105
    %1219 = vmatprep.subr.mxu0 0.0
    %1220 = vmatpush1.msra.mxu0 %v1106
    %1221 = vmatprep.subr.mxu0 0.0
    %1222 = vmatpush1.msra.mxu0 %v1107
    %1223 = vmatprep.subr.mxu0 0.0
    %1224 = vmatpush1.msra.mxu0 %v1108
    %1225 = vmatprep.subr.mxu0 0.0
    %1226 = vmatpush1.msra.mxu0 %v1109
    %1227 = vmatprep.subr.mxu0 0.0
    %1228 = vmatpush1.msra.mxu0 0.0
    %1229 = vmatprep.subr.mxu0 0.0
    %1230 = vmatpush1.msra.mxu0 0.0
    %1231 = vmatprep.subr.mxu0 0.0
    %1232 = vmatpush1.msra.mxu0 0.0
    %1233 = vmatprep.subr.mxu0 0.0
    %1234 = vmatpush1.msra.mxu0 0.0
    %1235 = vmatprep.subr.mxu0 0.0
    %1236 = vmatpush1.msra.mxu0 0.0
    %1237 = vmatprep.subr.mxu0 0.0
    %1238 = vmatpush1.msra.mxu0 0.0
    %1239 = vmatprep.subr.mxu0 0.0
    %1240 = vmatpush1.msra.mxu0 0.0
    %1241 = vmatprep.subr.mxu0 0.0
    %1242 = vmatpush1.msra.mxu0 0.0
    %1243 = vmatprep.subr.mxu0 0.0
    %1244 = vmatpush1.msra.mxu0 0.0
    %1245 = vmatprep.subr.mxu0 0.0
    %1246 = vmatpush1.msra.mxu0 0.0
    %1247 = vmatprep.subr.mxu0 0.0
    %1248 = vmatpush1.msra.mxu0 0.0
    %1249 = vmatprep.subr.mxu0 0.0
    %1250 = vmatpush1.msra.mxu0 0.0
    %1251 = vmatprep.subr.mxu0 0.0
    %1252 = vmatpush1.msra.mxu0 0.0
    %1253 = vmatprep.subr.mxu0 0.0
    %1254 = vmatpush1.msra.mxu0 0.0
    %1255 = vmatprep.subr.mxu0 0.0
    %1256 = vmatpush1.msra.mxu0 0.0
    %1257 = vmatprep.subr.mxu0 0.0
    %1258 = vmatpush1.msra.mxu0 0.0
    %1259 = vmatprep.subr.mxu0 0.0
    %1260 = vmatpush1.msra.mxu0 0.0
    %1261 = vmatprep.subr.mxu0 0.0
    %1262 = vmatpush1.msra.mxu0 0.0
    %1263 = vmatprep.subr.mxu0 0.0
    %1264 = vmatpush1.msra.mxu0 0.0
    %1265 = vmatprep.subr.mxu0 0.0
    %1266 = vmatpush1.msra.mxu0 0.0
    %1267 = vmatprep.subr.mxu0 0.0
    %1268 = vmatpush1.msra.mxu0 0.0
    %1269 = vmatprep.subr.mxu0 0.0
    %1270 = vmatpush1.msra.mxu0 0.0
    %1271 = vmatprep.subr.mxu0 0.0
    %1272 = vmatpush1.msra.mxu0 0.0
    %1273 = vmatprep.subr.mxu0 0.0
    %1274 = vmatpush1.msra.mxu0 0.0
    %1275 = vmatprep.mubr.f32.mxu0 0.0
    %1276 = vmatmul.mubr.f32.gmra.mrb[0].mxu0 %v1209
    %v1277 = vpop.f32.mrb[0].mxu0
    %v1278 = vadd.f32 %v1114, %v1277
    %v1279 = vpop.f32.mrb[0].mxu0
    %1280 = vdwg.mxu0
    %v1281 = vtanh.pop %v1278
    %vm1282 = vcmask 254976
    %1283 = vst.msk [vmem:[#allocation2] sm:$0x3] %vm1282, %v1281
    %v1284 = vsel %vm1118, %v1200, 0
    %1286 = vmatprep.subr.mxu0 0.0
    %1287 = vmatpush1.msra.mxu0 %v1098
    %1288 = vmatprep.subr.mxu0 0.0
    %1289 = vmatpush1.msra.mxu0 %v1099
    %1290 = vmatprep.subr.mxu0 0.0
    %1291 = vmatpush1.msra.mxu0 %v1100
    %1292 = vmatprep.subr.mxu0 0.0
    %1293 = vmatpush1.msra.mxu0 %v1101
    %1294 = vmatprep.subr.mxu0 0.0
    %1295 = vmatpush1.msra.mxu0 0.0
    %1296 = vmatprep.subr.mxu0 0.0
    %1297 = vmatpush1.msra.mxu0 0.0
    %1298 = vmatprep.subr.mxu0 0.0
    %1299 = vmatpush1.msra.mxu0 0.0
    %1300 = vmatprep.subr.mxu0 0.0
    %1301 = vmatpush1.msra.mxu0 0.0
    %1302 = vmatprep.subr.mxu0 0.0
    %1303 = vmatpush1.msra.mxu0 0.0
    %1304 = vmatprep.subr.mxu0 0.0
    %1305 = vmatpush1.msra.mxu0 0.0
    %1306 = vmatprep.subr.mxu0 0.0
    %1307 = vmatpush1.msra.mxu0 0.0
    %1308 = vmatprep.subr.mxu0 0.0
    %1309 = vmatpush1.msra.mxu0 0.0
    %1310 = vmatprep.subr.mxu0 0.0
    %1311 = vmatpush1.msra.mxu0 0.0
    %1312 = vmatprep.subr.mxu0 0.0
    %1313 = vmatpush1.msra.mxu0 0.0
    %1314 = vmatprep.subr.mxu0 0.0
    %1315 = vmatpush1.msra.mxu0 0.0
    %1316 = vmatprep.subr.mxu0 0.0
    %1317 = vmatpush1.msra.mxu0 0.0
    %1318 = vmatprep.subr.mxu0 0.0
    %1319 = vmatpush1.msra.mxu0 0.0
    %1320 = vmatprep.subr.mxu0 0.0
    %1321 = vmatpush1.msra.mxu0 0.0
    %1322 = vmatprep.subr.mxu0 0.0
    %1323 = vmatpush1.msra.mxu0 0.0
    %1324 = vmatprep.subr.mxu0 0.0
    %1325 = vmatpush1.msra.mxu0 0.0
    %1326 = vmatprep.subr.mxu0 0.0
    %1327 = vmatpush1.msra.mxu0 0.0
    %1328 = vmatprep.subr.mxu0 0.0
    %1329 = vmatpush1.msra.mxu0 0.0
    %1330 = vmatprep.subr.mxu0 0.0
    %1331 = vmatpush1.msra.mxu0 0.0
    %1332 = vmatprep.subr.mxu0 0.0
    %1333 = vmatpush1.msra.mxu0 0.0
    %1334 = vmatprep.subr.mxu0 0.0
    %1335 = vmatpush1.msra.mxu0 0.0
    %1336 = vmatprep.subr.mxu0 0.0
    %1337 = vmatpush1.msra.mxu0 0.0
    %1338 = vmatprep.subr.mxu0 0.0
    %1339 = vmatpush1.msra.mxu0 0.0
    %1340 = vmatprep.subr.mxu0 0.0
    %1341 = vmatpush1.msra.mxu0 0.0
    %1342 = vmatprep.subr.mxu0 0.0
    %1343 = vmatpush1.msra.mxu0 0.0
    %1344 = vmatprep.subr.mxu0 0.0
    %1345 = vmatpush1.msra.mxu0 0.0
    %1346 = vmatprep.subr.mxu0 0.0
    %1347 = vmatpush1.msra.mxu0 0.0
    %1348 = vmatprep.subr.mxu0 0.0
    %1349 = vmatpush1.msra.mxu0 0.0
    %1350 = vmatprep.mubr.f32.mxu0 0.0
    %1351 = vmatmul.mubr.f32.gmra.mrb[0].mxu0 %v1284
    %v1352 = vpop.f32.mrb[0].mxu0
    %v1353 = vadd.f32 0.0, %v1352
    %v1354 = vpop.f32.mrb[0].mxu0
    %1355 = vdwg.mxu0
    %v1357 = vrot.slane %v1353, 6
    %1358 = vrot.lane.b32.xlu0 %v1357, 32
    %v1359 = vpop.permute.xlu0 %1358
    %v1361 = vadd.f32 %v1096, %v1359
    %v1362 = vtanh.pop %v1361
    %1364 = vrot.lane.b32.xlu0 %v1362, 96
    %v1365 = vpop.permute.xlu0 %1364
    %v1368 = vrot.slane %v1281, 6
    %1369 = vrot.lane.b32.xlu0 %v1368, 32
    %v1370 = vpop.permute.xlu0 %1369
    %v1372 = vsel %vm1118, %v1365, %v1370
    %v1374 = vrot.slane %v1372, 2
    %v1375 = vsel %vm1207, %v1374, 0
    %1377 = vmatprep.subr.mxu0 0.0
    %1378 = vmatpush1.msra.mxu0 %v1102
    %1379 = vmatprep.subr.mxu0 0.0
    %1380 = vmatpush1.msra.mxu0 %v1103
    %1381 = vmatprep.subr.mxu0 0.0
    %1382 = vmatpush1.msra.mxu0 %v1104
    %1383 = vmatprep.subr.mxu0 0.0
    %1384 = vmatpush1.msra.mxu0 %v1105
    %1385 = vmatprep.subr.mxu0 0.0
    %1386 = vmatpush1.msra.mxu0 %v1106
    %1387 = vmatprep.subr.mxu0 0.0
    %1388 = vmatpush1.msra.mxu0 %v1107
    %1389 = vmatprep.subr.mxu0 0.0
    %1390 = vmatpush1.msra.mxu0 %v1108
    %1391 = vmatprep.subr.mxu0 0.0
    %1392 = vmatpush1.msra.mxu0 %v1109
    %1393 = vmatprep.subr.mxu0 0.0
    %1394 = vmatpush1.msra.mxu0 0.0
    %1395 = vmatprep.subr.mxu0 0.0
    %1396 = vmatpush1.msra.mxu0 0.0
    %1397 = vmatprep.subr.mxu0 0.0
    %1398 = vmatpush1.msra.mxu0 0.0
    %1399 = vmatprep.subr.mxu0 0.0
    %1400 = vmatpush1.msra.mxu0 0.0
    %1401 = vmatprep.subr.mxu0 0.0
    %1402 = vmatpush1.msra.mxu0 0.0
    %1403 = vmatprep.subr.mxu0 0.0
    %1404 = vmatpush1.msra.mxu0 0.0
    %1405 = vmatprep.subr.mxu0 0.0
    %1406 = vmatpush1.msra.mxu0 0.0
    %1407 = vmatprep.subr.mxu0 0.0
    %1408 = vmatpush1.msra.mxu0 0.0
    %1409 = vmatprep.subr.mxu0 0.0
    %1410 = vmatpush1.msra.mxu0 0.0
    %1411 = vmatprep.subr.mxu0 0.0
    %1412 = vmatpush1.msra.mxu0 0.0
    %1413 = vmatprep.subr.mxu0 0.0
    %1414 = vmatpush1.msra.mxu0 0.0
    %1415 = vmatprep.subr.mxu0 0.0
    %1416 = vmatpush1.msra.mxu0 0.0
    %1417 = vmatprep.subr.mxu0 0.0
    %1418 = vmatpush1.msra.mxu0 0.0
    %1419 = vmatprep.subr.mxu0 0.0
    %1420 = vmatpush1.msra.mxu0 0.0
    %1421 = vmatprep.subr.mxu0 0.0
    %1422 = vmatpush1.msra.mxu0 0.0
    %1423 = vmatprep.subr.mxu0 0.0
    %1424 = vmatpush1.msra.mxu0 0.0
    %1425 = vmatprep.subr.mxu0 0.0
    %1426 = vmatpush1.msra.mxu0 0.0
    %1427 = vmatprep.subr.mxu0 0.0
    %1428 = vmatpush1.msra.mxu0 0.0
    %1429 = vmatprep.subr.mxu0 0.0
    %1430 = vmatpush1.msra.mxu0 0.0
    %1431 = vmatprep.subr.mxu0 0.0
    %1432 = vmatpush1.msra.mxu0 0.0
    %1433 = vmatprep.subr.mxu0 0.0
    %1434 = vmatpush1.msra.mxu0 0.0
    %1435 = vmatprep.subr.mxu0 0.0
    %1436 = vmatpush1.msra.mxu0 0.0
    %1437 = vmatprep.subr.mxu0 0.0
    %1438 = vmatpush1.msra.mxu0 0.0
    %1439 = vmatprep.subr.mxu0 0.0
    %1440 = vmatpush1.msra.mxu0 0.0
    %1441 = vmatprep.mubr.f32.mxu0 0.0
    %1442 = vmatmul.mubr.f32.gmra.mrb[0].mxu0 %v1375
    %v1443 = vpop.f32.mrb[0].mxu0
    %v1444 = vadd.f32 %v1114, %v1443
    %v1445 = vpop.f32.mrb[0].mxu0
    %1446 = vdwg.mxu0
    %v1447 = vtanh.pop %v1444
    %1448 = vst.msk [vmem:[#allocation2 + $0x2] sm:$0x3] %vm1282, %v1447
    %v1449 = vrot.slane %v1362, 2
    %1450 = vrot.lane.b32.xlu0 %v1449, 96
    %v1451 = vpop.permute.xlu0 %1450
    %v1452 = vsel %vm1118, %v1451, 0
    %1454 = vmatprep.subr.mxu0 0.0
    %1455 = vmatpush1.msra.mxu0 %v1098
    %1456 = vmatprep.subr.mxu0 0.0
    %1457 = vmatpush1.msra.mxu0 %v1099
    %1458 = vmatprep.subr.mxu0 0.0
    %1459 = vmatpush1.msra.mxu0 %v1100
    %1460 = vmatprep.subr.mxu0 0.0
    %1461 = vmatpush1.msra.mxu0 %v1101
    %1462 = vmatprep.subr.mxu0 0.0
    %1463 = vmatpush1.msra.mxu0 0.0
    %1464 = vmatprep.subr.mxu0 0.0
    %1465 = vmatpush1.msra.mxu0 0.0
    %1466 = vmatprep.subr.mxu0 0.0
    %1467 = vmatpush1.msra.mxu0 0.0
    %1468 = vmatprep.subr.mxu0 0.0
    %1469 = vmatpush1.msra.mxu0 0.0
    %1470 = vmatprep.subr.mxu0 0.0
    %1471 = vmatpush1.msra.mxu0 0.0
    %1472 = vmatprep.subr.mxu0 0.0
    %1473 = vmatpush1.msra.mxu0 0.0
    %1474 = vmatprep.subr.mxu0 0.0
    %1475 = vmatpush1.msra.mxu0 0.0
    %1476 = vmatprep.subr.mxu0 0.0
    %1477 = vmatpush1.msra.mxu0 0.0
    %1478 = vmatprep.subr.mxu0 0.0
    %1479 = vmatpush1.msra.mxu0 0.0
    %1480 = vmatprep.subr.mxu0 0.0
    %1481 = vmatpush1.msra.mxu0 0.0
    %1482 = vmatprep.subr.mxu0 0.0
    %1483 = vmatpush1.msra.mxu0 0.0
    %1484 = vmatprep.subr.mxu0 0.0
    %1485 = vmatpush1.msra.mxu0 0.0
    %1486 = vmatprep.subr.mxu0 0.0
    %1487 = vmatpush1.msra.mxu0 0.0
    %1488 = vmatprep.subr.mxu0 0.0
    %1489 = vmatpush1.msra.mxu0 0.0
    %1490 = vmatprep.subr.mxu0 0.0
    %1491 = vmatpush1.msra.mxu0 0.0
    %1492 = vmatprep.subr.mxu0 0.0
    %1493 = vmatpush1.msra.mxu0 0.0
    %1494 = vmatprep.subr.mxu0 0.0
    %1495 = vmatpush1.msra.mxu0 0.0
    %1496 = vmatprep.subr.mxu0 0.0
    %1497 = vmatpush1.msra.mxu0 0.0
    %1498 = vmatprep.subr.mxu0 0.0
    %1499 = vmatpush1.msra.mxu0 0.0
    %1500 = vmatprep.subr.mxu0 0.0
    %1501 = vmatpush1.msra.mxu0 0.0
    %1502 = vmatprep.subr.mxu0 0.0
    %1503 = vmatpush1.msra.mxu0 0.0
    %1504 = vmatprep.subr.mxu0 0.0
    %1505 = vmatpush1.msra.mxu0 0.0
    %1506 = vmatprep.subr.mxu0 0.0
    %1507 = vmatpush1.msra.mxu0 0.0
    %1508 = vmatprep.subr.mxu0 0.0
    %1509 = vmatpush1.msra.mxu0 0.0
    %1510 = vmatprep.subr.mxu0 0.0
    %1511 = vmatpush1.msra.mxu0 0.0
    %1512 = vmatprep.subr.mxu0 0.0
    %1513 = vmatpush1.msra.mxu0 0.0
    %1514 = vmatprep.subr.mxu0 0.0
    %1515 = vmatpush1.msra.mxu0 0.0
    %1516 = vmatprep.subr.mxu0 0.0
    %1517 = vmatpush1.msra.mxu0 0.0
    %1518 = vmatprep.mubr.f32.mxu0 0.0
    %1519 = vmatmul.mubr.f32.gmra.mrb[0].mxu0 %v1452
    %v1520 = vpop.f32.mrb[0].mxu0
    %v1521 = vadd.f32 0.0, %v1520
    %v1522 = vpop.f32.mrb[0].mxu0
    %1523 = vdwg.mxu0
    %v1525 = vrot.slane %v1521, 4
    %1526 = vrot.lane.b32.xlu0 %v1525, 32
    %v1527 = vpop.permute.xlu0 %1526
    %v1529 = vadd.f32 %v1096, %v1527
    %v1530 = vtanh.pop %v1529
    %1532 = vrot.lane.b32.xlu0 %v1530, 96
    %v1533 = vpop.permute.xlu0 %1532
    %v1536 = vrot.slane %v1447, 4
    %1537 = vrot.lane.b32.xlu0 %v1536, 32
    %v1538 = vpop.permute.xlu0 %1537
    %v1540 = vsel %vm1118, %v1533, %v1538
    %v1542 = vrot.slane %v1540, 4
    %v1543 = vsel %vm1207, %v1542, 0
    %1545 = vmatprep.subr.mxu0 0.0
    %1546 = vmatpush1.msra.mxu0 %v1102
    %1547 = vmatprep.subr.mxu0 0.0
    %1548 = vmatpush1.msra.mxu0 %v1103
    %1549 = vmatprep.subr.mxu0 0.0
    %1550 = vmatpush1.msra.mxu0 %v1104
    %1551 = vmatprep.subr.mxu0 0.0
    %1552 = vmatpush1.msra.mxu0 %v1105
    %1553 = vmatprep.subr.mxu0 0.0
    %1554 = vmatpush1.msra.mxu0 %v1106
    %1555 = vmatprep.subr.mxu0 0.0
    %1556 = vmatpush1.msra.mxu0 %v1107
    %1557 = vmatprep.subr.mxu0 0.0
    %1558 = vmatpush1.msra.mxu0 %v1108
    %1559 = vmatprep.subr.mxu0 0.0
    %1560 = vmatpush1.msra.mxu0 %v1109
    %1561 = vmatprep.subr.mxu0 0.0
    %1562 = vmatpush1.msra.mxu0 0.0
    %1563 = vmatprep.subr.mxu0 0.0
    %1564 = vmatpush1.msra.mxu0 0.0
    %1565 = vmatprep.subr.mxu0 0.0
    %1566 = vmatpush1.msra.mxu0 0.0
    %1567 = vmatprep.subr.mxu0 0.0
    %1568 = vmatpush1.msra.mxu0 0.0
    %1569 = vmatprep.subr.mxu0 0.0
    %1570 = vmatpush1.msra.mxu0 0.0
    %1571 = vmatprep.subr.mxu0 0.0
    %1572 = vmatpush1.msra.mxu0 0.0
    %1573 = vmatprep.subr.mxu0 0.0
    %1574 = vmatpush1.msra.mxu0 0.0
    %1575 = vmatprep.subr.mxu0 0.0
    %1576 = vmatpush1.msra.mxu0 0.0
    %1577 = vmatprep.subr.mxu0 0.0
    %1578 = vmatpush1.msra.mxu0 0.0
    %1579 = vmatprep.subr.mxu0 0.0
    %1580 = vmatpush1.msra.mxu0 0.0
    %1581 = vmatprep.subr.mxu0 0.0
    %1582 = vmatpush1.msra.mxu0 0.0
    %1583 = vmatprep.subr.mxu0 0.0
    %1584 = vmatpush1.msra.mxu0 0.0
    %1585 = vmatprep.subr.mxu0 0.0
    %1586 = vmatpush1.msra.mxu0 0.0
    %1587 = vmatprep.subr.mxu0 0.0
    %1588 = vmatpush1.msra.mxu0 0.0
    %1589 = vmatprep.subr.mxu0 0.0
    %1590 = vmatpush1.msra.mxu0 0.0
    %1591 = vmatprep.subr.mxu0 0.0
    %1592 = vmatpush1.msra.mxu0 0.0
    %1593 = vmatprep.subr.mxu0 0.0
    %1594 = vmatpush1.msra.mxu0 0.0
    %1595 = vmatprep.subr.mxu0 0.0
    %1596 = vmatpush1.msra.mxu0 0.0
    %1597 = vmatprep.subr.mxu0 0.0
    %1598 = vmatpush1.msra.mxu0 0.0
    %1599 = vmatprep.subr.mxu0 0.0
    %1600 = vmatpush1.msra.mxu0 0.0
    %1601 = vmatprep.subr.mxu0 0.0
    %1602 = vmatpush1.msra.mxu0 0.0
    %1603 = vmatprep.subr.mxu0 0.0
    %1604 = vmatpush1.msra.mxu0 0.0
    %1605 = vmatprep.subr.mxu0 0.0
    %1606 = vmatpush1.msra.mxu0 0.0
    %1607 = vmatprep.subr.mxu0 0.0
    %1608 = vmatpush1.msra.mxu0 0.0
    %1609 = vmatprep.mubr.f32.mxu0 0.0
    %1610 = vmatmul.mubr.f32.gmra.mrb[0].mxu0 %v1543
    %v1611 = vpop.f32.mrb[0].mxu0
    %v1612 = vadd.f32 %v1114, %v1611
    %v1613 = vpop.f32.mrb[0].mxu0
    %1614 = vdwg.mxu0
    %v1615 = vtanh.pop %v1612
    %1616 = vst.msk [vmem:[#allocation2 + $0x4] sm:$0x3] %vm1282, %v1615
    %v1617 = vrot.slane %v1530, 4
    %1618 = vrot.lane.b32.xlu0 %v1617, 96
    %v1619 = vpop.permute.xlu0 %1618
    %v1620 = vsel %vm1118, %v1619, 0
    %1622 = vmatprep.subr.mxu0 0.0
    %1623 = vmatpush1.msra.mxu0 %v1098
    %1624 = vmatprep.subr.mxu0 0.0
    %1625 = vmatpush1.msra.mxu0 %v1099
    %1626 = vmatprep.subr.mxu0 0.0
    %1627 = vmatpush1.msra.mxu0 %v1100
    %1628 = vmatprep.subr.mxu0 0.0
    %1629 = vmatpush1.msra.mxu0 %v1101
    %1630 = vmatprep.subr.mxu0 0.0
    %1631 = vmatpush1.msra.mxu0 0.0
    %1632 = vmatprep.subr.mxu0 0.0
    %1633 = vmatpush1.msra.mxu0 0.0
    %1634 = vmatprep.subr.mxu0 0.0
    %1635 = vmatpush1.msra.mxu0 0.0
    %1636 = vmatprep.subr.mxu0 0.0
    %1637 = vmatpush1.msra.mxu0 0.0
    %1638 = vmatprep.subr.mxu0 0.0
    %1639 = vmatpush1.msra.mxu0 0.0
    %1640 = vmatprep.subr.mxu0 0.0
    %1641 = vmatpush1.msra.mxu0 0.0
    %1642 = vmatprep.subr.mxu0 0.0
    %1643 = vmatpush1.msra.mxu0 0.0
    %1644 = vmatprep.subr.mxu0 0.0
    %1645 = vmatpush1.msra.mxu0 0.0
    %1646 = vmatprep.subr.mxu0 0.0
    %1647 = vmatpush1.msra.mxu0 0.0
    %1648 = vmatprep.subr.mxu0 0.0
    %1649 = vmatpush1.msra.mxu0 0.0
    %1650 = vmatprep.subr.mxu0 0.0
    %1651 = vmatpush1.msra.mxu0 0.0
    %1652 = vmatprep.subr.mxu0 0.0
    %1653 = vmatpush1.msra.mxu0 0.0
    %1654 = vmatprep.subr.mxu0 0.0
    %1655 = vmatpush1.msra.mxu0 0.0
    %1656 = vmatprep.subr.mxu0 0.0
    %1657 = vmatpush1.msra.mxu0 0.0
    %1658 = vmatprep.subr.mxu0 0.0
    %1659 = vmatpush1.msra.mxu0 0.0
    %1660 = vmatprep.subr.mxu0 0.0
    %1661 = vmatpush1.msra.mxu0 0.0
    %1662 = vmatprep.subr.mxu0 0.0
    %1663 = vmatpush1.msra.mxu0 0.0
    %1664 = vmatprep.subr.mxu0 0.0
    %1665 = vmatpush1.msra.mxu0 0.0
    %1666 = vmatprep.subr.mxu0 0.0
    %1667 = vmatpush1.msra.mxu0 0.0
    %1668 = vmatprep.subr.mxu0 0.0
    %1669 = vmatpush1.msra.mxu0 0.0
    %1670 = vmatprep.subr.mxu0 0.0
    %1671 = vmatpush1.msra.mxu0 0.0
    %1672 = vmatprep.subr.mxu0 0.0
    %1673 = vmatpush1.msra.mxu0 0.0
    %1674 = vmatprep.subr.mxu0 0.0
    %1675 = vmatpush1.msra.mxu0 0.0
    %1676 = vmatprep.subr.mxu0 0.0
    %1677 = vmatpush1.msra.mxu0 0.0
    %1678 = vmatprep.subr.mxu0 0.0
    %1679 = vmatpush1.msra.mxu0 0.0
    %1680 = vmatprep.subr.mxu0 0.0
    %1681 = vmatpush1.msra.mxu0 0.0
    %1682 = vmatprep.subr.mxu0 0.0
    %1683 = vmatpush1.msra.mxu0 0.0
    %1684 = vmatprep.subr.mxu0 0.0
    %1685 = vmatpush1.msra.mxu0 0.0
    %1686 = vmatprep.mubr.f32.mxu0 0.0
    %1687 = vmatmul.mubr.f32.gmra.mrb[0].mxu0 %v1620
    %v1688 = vpop.f32.mrb[0].mxu0
    %v1689 = vadd.f32 0.0, %v1688
    %v1690 = vpop.f32.mrb[0].mxu0
    %1691 = vdwg.mxu0
    %v1693 = vrot.slane %v1689, 2
    %1694 = vrot.lane.b32.xlu0 %v1693, 32
    %v1695 = vpop.permute.xlu0 %1694
    %v1697 = vadd.f32 %v1096, %v1695
    %v1698 = vtanh.pop %v1697
    %1700 = vrot.lane.b32.xlu0 %v1698, 96
    %v1701 = vpop.permute.xlu0 %1700
    %v1704 = vrot.slane %v1615, 2
    %1705 = vrot.lane.b32.xlu0 %v1704, 32
    %v1706 = vpop.permute.xlu0 %1705
    %v1708 = vsel %vm1118, %v1701, %v1706
    %v1710 = vrot.slane %v1708, 6
    %v1711 = vsel %vm1207, %v1710, 0
    %1713 = vmatprep.subr.mxu0 0.0
    %1714 = vmatpush1.msra.mxu0 %v1102
    %1715 = vmatprep.subr.mxu0 0.0
    %1716 = vmatpush1.msra.mxu0 %v1103
    %1717 = vmatprep.subr.mxu0 0.0
    %1718 = vmatpush1.msra.mxu0 %v1104
    %1719 = vmatprep.subr.mxu0 0.0
    %1720 = vmatpush1.msra.mxu0 %v1105
    %1721 = vmatprep.subr.mxu0 0.0
    %1722 = vmatpush1.msra.mxu0 %v1106
    %1723 = vmatprep.subr.mxu0 0.0
    %1724 = vmatpush1.msra.mxu0 %v1107
    %1725 = vmatprep.subr.mxu0 0.0
    %1726 = vmatpush1.msra.mxu0 %v1108
    %1727 = vmatprep.subr.mxu0 0.0
    %1728 = vmatpush1.msra.mxu0 %v1109
    %1729 = vmatprep.subr.mxu0 0.0
    %1730 = vmatpush1.msra.mxu0 0.0
    %1731 = vmatprep.subr.mxu0 0.0
    %1732 = vmatpush1.msra.mxu0 0.0
    %1733 = vmatprep.subr.mxu0 0.0
    %1734 = vmatpush1.msra.mxu0 0.0
    %1735 = vmatprep.subr.mxu0 0.0
    %1736 = vmatpush1.msra.mxu0 0.0
    %1737 = vmatprep.subr.mxu0 0.0
    %1738 = vmatpush1.msra.mxu0 0.0
    %1739 = vmatprep.subr.mxu0 0.0
    %1740 = vmatpush1.msra.mxu0 0.0
    %1741 = vmatprep.subr.mxu0 0.0
    %1742 = vmatpush1.msra.mxu0 0.0
    %1743 = vmatprep.subr.mxu0 0.0
    %1744 = vmatpush1.msra.mxu0 0.0
    %1745 = vmatprep.subr.mxu0 0.0
    %1746 = vmatpush1.msra.mxu0 0.0
    %1747 = vmatprep.subr.mxu0 0.0
    %1748 = vmatpush1.msra.mxu0 0.0
    %1749 = vmatprep.subr.mxu0 0.0
    %1750 = vmatpush1.msra.mxu0 0.0
    %1751 = vmatprep.subr.mxu0 0.0
    %1752 = vmatpush1.msra.mxu0 0.0
    %1753 = vmatprep.subr.mxu0 0.0
    %1754 = vmatpush1.msra.mxu0 0.0
    %1755 = vmatprep.subr.mxu0 0.0
    %1756 = vmatpush1.msra.mxu0 0.0
    %1757 = vmatprep.subr.mxu0 0.0
    %1758 = vmatpush1.msra.mxu0 0.0
    %1759 = vmatprep.subr.mxu0 0.0
    %1760 = vmatpush1.msra.mxu0 0.0
    %1761 = vmatprep.subr.mxu0 0.0
    %1762 = vmatpush1.msra.mxu0 0.0
    %1763 = vmatprep.subr.mxu0 0.0
    %1764 = vmatpush1.msra.mxu0 0.0
    %1765 = vmatprep.subr.mxu0 0.0
    %1766 = vmatpush1.msra.mxu0 0.0
    %1767 = vmatprep.subr.mxu0 0.0
    %1768 = vmatpush1.msra.mxu0 0.0
    %1769 = vmatprep.subr.mxu0 0.0
    %1770 = vmatpush1.msra.mxu0 0.0
    %1771 = vmatprep.subr.mxu0 0.0
    %1772 = vmatpush1.msra.mxu0 0.0
    %1773 = vmatprep.subr.mxu0 0.0
    %1774 = vmatpush1.msra.mxu0 0.0
    %1775 = vmatprep.subr.mxu0 0.0
    %1776 = vmatpush1.msra.mxu0 0.0
    %1777 = vmatprep.mubr.f32.mxu0 0.0
    %1778 = vmatmul.mubr.f32.gmra.mrb[0].mxu0 %v1711
    %v1779 = vpop.f32.mrb[0].mxu0
    %v1780 = vadd.f32 %v1114, %v1779
    %v1781 = vpop.f32.mrb[0].mxu0
    %1782 = vdwg.mxu0
    %v1783 = vtanh.pop %v1780
    %1784 = vst.msk [vmem:[#allocation2 + $0x6] sm:$0x3] %vm1282, %v1783
    %v1785 = vrot.slane %v1698, 6
    %1786 = vrot.lane.b32.xlu0 %v1785, 96
    %v1787 = vpop.permute.xlu0 %1786
    %v1788 = vsel %vm1118, %v1787, 0
    %1790 = vmatprep.subr.mxu0 0.0
    %1791 = vmatpush1.msra.mxu0 %v1098
    %1792 = vmatprep.subr.mxu0 0.0
    %1793 = vmatpush1.msra.mxu0 %v1099
    %1794 = vmatprep.subr.mxu0 0.0
    %1795 = vmatpush1.msra.mxu0 %v1100
    %1796 = vmatprep.subr.mxu0 0.0
    %1797 = vmatpush1.msra.mxu0 %v1101
    %1798 = vmatprep.subr.mxu0 0.0
    %1799 = vmatpush1.msra.mxu0 0.0
    %1800 = vmatprep.subr.mxu0 0.0
    %1801 = vmatpush1.msra.mxu0 0.0
    %1802 = vmatprep.subr.mxu0 0.0
    %1803 = vmatpush1.msra.mxu0 0.0
    %1804 = vmatprep.subr.mxu0 0.0
    %1805 = vmatpush1.msra.mxu0 0.0
    %1806 = vmatprep.subr.mxu0 0.0
    %1807 = vmatpush1.msra.mxu0 0.0
    %1808 = vmatprep.subr.mxu0 0.0
    %1809 = vmatpush1.msra.mxu0 0.0
    %1810 = vmatprep.subr.mxu0 0.0
    %1811 = vmatpush1.msra.mxu0 0.0
    %1812 = vmatprep.subr.mxu0 0.0
    %1813 = vmatpush1.msra.mxu0 0.0
    %1814 = vmatprep.subr.mxu0 0.0
    %1815 = vmatpush1.msra.mxu0 0.0
    %1816 = vmatprep.subr.mxu0 0.0
    %1817 = vmatpush1.msra.mxu0 0.0
    %1818 = vmatprep.subr.mxu0 0.0
    %1819 = vmatpush1.msra.mxu0 0.0
    %1820 = vmatprep.subr.mxu0 0.0
    %1821 = vmatpush1.msra.mxu0 0.0
    %1822 = vmatprep.subr.mxu0 0.0
    %1823 = vmatpush1.msra.mxu0 0.0
    %1824 = vmatprep.subr.mxu0 0.0
    %1825 = vmatpush1.msra.mxu0 0.0
    %1826 = vmatprep.subr.mxu0 0.0
    %1827 = vmatpush1.msra.mxu0 0.0
    %1828 = vmatprep.subr.mxu0 0.0
    %1829 = vmatpush1.msra.mxu0 0.0
    %1830 = vmatprep.subr.mxu0 0.0
    %1831 = vmatpush1.msra.mxu0 0.0
    %1832 = vmatprep.subr.mxu0 0.0
    %1833 = vmatpush1.msra.mxu0 0.0
    %1834 = vmatprep.subr.mxu0 0.0
    %1835 = vmatpush1.msra.mxu0 0.0
    %1836 = vmatprep.subr.mxu0 0.0
    %1837 = vmatpush1.msra.mxu0 0.0
    %1838 = vmatprep.subr.mxu0 0.0
    %1839 = vmatpush1.msra.mxu0 0.0
    %1840 = vmatprep.subr.mxu0 0.0
    %1841 = vmatpush1.msra.mxu0 0.0
    %1842 = vmatprep.subr.mxu0 0.0
    %1843 = vmatpush1.msra.mxu0 0.0
    %1844 = vmatprep.subr.mxu0 0.0
    %1845 = vmatpush1.msra.mxu0 0.0
    %1846 = vmatprep.subr.mxu0 0.0
    %1847 = vmatpush1.msra.mxu0 0.0
    %1848 = vmatprep.subr.mxu0 0.0
    %1849 = vmatpush1.msra.mxu0 0.0
    %1850 = vmatprep.subr.mxu0 0.0
    %1851 = vmatpush1.msra.mxu0 0.0
    %1852 = vmatprep.subr.mxu0 0.0
    %1853 = vmatpush1.msra.mxu0 0.0
    %1854 = vmatprep.mubr.f32.mxu0 0.0
    %1855 = vmatmul.mubr.f32.gmra.mrb[0].mxu0 %v1788
    %v1856 = vpop.f32.mrb[0].mxu0
    %v1857 = vadd.f32 0.0, %v1856
    %v1858 = vpop.f32.mrb[0].mxu0
    %1859 = vdwg.mxu0
    %1861 = vrot.lane.b32.xlu0 %v1857, 32
    %v1862 = vpop.permute.xlu0 %1861
    %v1864 = vadd.f32 %v1097, %v1862
    %v1865 = vtanh.pop %v1864
    %1867 = vrot.lane.b32.xlu0 %v1865, 96
    %v1868 = vpop.permute.xlu0 %1867
    %1871 = vrot.lane.b32.xlu0 %v1783, 32
    %v1872 = vpop.permute.xlu0 %1871
    %v1874 = vsel %vm1118, %v1868, %v1872
    %v1876 = vsel %vm1207, %v1874, 0
    %1878 = vmatprep.subr.mxu0 0.0
    %1879 = vmatpush1.msra.mxu0 %v1102
    %1880 = vmatprep.subr.mxu0 0.0
    %1881 = vmatpush1.msra.mxu0 %v1103
    %1882 = vmatprep.subr.mxu0 0.0
    %1883 = vmatpush1.msra.mxu0 %v1104
    %1884 = vmatprep.subr.mxu0 0.0
    %1885 = vmatpush1.msra.mxu0 %v1105
    %1886 = vmatprep.subr.mxu0 0.0
    %1887 = vmatpush1.msra.mxu0 %v1106
    %1888 = vmatprep.subr.mxu0 0.0
    %1889 = vmatpush1.msra.mxu0 %v1107
    %1890 = vmatprep.subr.mxu0 0.0
    %1891 = vmatpush1.msra.mxu0 %v1108
    %1892 = vmatprep.subr.mxu0 0.0
    %1893 = vmatpush1.msra.mxu0 %v1109
    %1894 = vmatprep.subr.mxu0 0.0
    %1895 = vmatpush1.msra.mxu0 0.0
    %1896 = vmatprep.subr.mxu0 0.0
    %1897 = vmatpush1.msra.mxu0 0.0
    %1898 = vmatprep.subr.mxu0 0.0
    %1899 = vmatpush1.msra.mxu0 0.0
    %1900 = vmatprep.subr.mxu0 0.0
    %1901 = vmatpush1.msra.mxu0 0.0
    %1902 = vmatprep.subr.mxu0 0.0
    %1903 = vmatpush1.msra.mxu0 0.0
    %1904 = vmatprep.subr.mxu0 0.0
    %1905 = vmatpush1.msra.mxu0 0.0
    %1906 = vmatprep.subr.mxu0 0.0
    %1907 = vmatpush1.msra.mxu0 0.0
    %1908 = vmatprep.subr.mxu0 0.0
    %1909 = vmatpush1.msra.mxu0 0.0
    %1910 = vmatprep.subr.mxu0 0.0
    %1911 = vmatpush1.msra.mxu0 0.0
    %1912 = vmatprep.subr.mxu0 0.0
    %1913 = vmatpush1.msra.mxu0 0.0
    %1914 = vmatprep.subr.mxu0 0.0
    %1915 = vmatpush1.msra.mxu0 0.0
    %1916 = vmatprep.subr.mxu0 0.0
    %1917 = vmatpush1.msra.mxu0 0.0
    %1918 = vmatprep.subr.mxu0 0.0
    %1919 = vmatpush1.msra.mxu0 0.0
    %1920 = vmatprep.subr.mxu0 0.0
    %1921 = vmatpush1.msra.mxu0 0.0
    %1922 = vmatprep.subr.mxu0 0.0
    %1923 = vmatpush1.msra.mxu0 0.0
    %1924 = vmatprep.subr.mxu0 0.0
    %1925 = vmatpush1.msra.mxu0 0.0
    %1926 = vmatprep.subr.mxu0 0.0
    %1927 = vmatpush1.msra.mxu0 0.0
    %1928 = vmatprep.subr.mxu0 0.0
    %1929 = vmatpush1.msra.mxu0 0.0
    %1930 = vmatprep.subr.mxu0 0.0
    %1931 = vmatpush1.msra.mxu0 0.0
    %1932 = vmatprep.subr.mxu0 0.0
    %1933 = vmatpush1.msra.mxu0 0.0
    %1934 = vmatprep.subr.mxu0 0.0
    %1935 = vmatpush1.msra.mxu0 0.0
    %1936 = vmatprep.subr.mxu0 0.0
    %1937 = vmatpush1.msra.mxu0 0.0
    %1938 = vmatprep.subr.mxu0 0.0
    %1939 = vmatpush1.msra.mxu0 0.0
    %1940 = vmatprep.subr.mxu0 0.0
    %1941 = vmatpush1.msra.mxu0 0.0
    %1942 = vmatprep.mubr.f32.mxu0 0.0
    %1943 = vmatmul.mubr.f32.gmra.mrb[0].mxu0 %v1876
    %v1944 = vpop.f32.mrb[0].mxu0
    %v1945 = vadd.f32 %v1114, %v1944
    %v1946 = vpop.f32.mrb[0].mxu0
    %1947 = vdwg.mxu0
    %v1948 = vtanh.pop %v1945
    %1949 = vst.msk [vmem:[#allocation2 + $0x8] sm:$0x3] %vm1282, %v1948
    %v1950 = vsel %vm1118, %v1868, 0
    %1952 = vmatprep.subr.mxu0 0.0
    %1953 = vmatpush1.msra.mxu0 %v1098
    %1954 = vmatprep.subr.mxu0 0.0
    %1955 = vmatpush1.msra.mxu0 %v1099
    %1956 = vmatprep.subr.mxu0 0.0
    %1957 = vmatpush1.msra.mxu0 %v1100
    %1958 = vmatprep.subr.mxu0 0.0
    %1959 = vmatpush1.msra.mxu0 %v1101
    %1960 = vmatprep.subr.mxu0 0.0
    %1961 = vmatpush1.msra.mxu0 0.0
    %1962 = vmatprep.subr.mxu0 0.0
    %1963 = vmatpush1.msra.mxu0 0.0
    %1964 = vmatprep.subr.mxu0 0.0
    %1965 = vmatpush1.msra.mxu0 0.0
    %1966 = vmatprep.subr.mxu0 0.0
    %1967 = vmatpush1.msra.mxu0 0.0
    %1968 = vmatprep.subr.mxu0 0.0
    %1969 = vmatpush1.msra.mxu0 0.0
    %1970 = vmatprep.subr.mxu0 0.0
    %1971 = vmatpush1.msra.mxu0 0.0
    %1972 = vmatprep.subr.mxu0 0.0
    %1973 = vmatpush1.msra.mxu0 0.0
    %1974 = vmatprep.subr.mxu0 0.0
    %1975 = vmatpush1.msra.mxu0 0.0
    %1976 = vmatprep.subr.mxu0 0.0
    %1977 = vmatpush1.msra.mxu0 0.0
    %1978 = vmatprep.subr.mxu0 0.0
    %1979 = vmatpush1.msra.mxu0 0.0
    %1980 = vmatprep.subr.mxu0 0.0
    %1981 = vmatpush1.msra.mxu0 0.0
    %1982 = vmatprep.subr.mxu0 0.0
    %1983 = vmatpush1.msra.mxu0 0.0
    %1984 = vmatprep.subr.mxu0 0.0
    %1985 = vmatpush1.msra.mxu0 0.0
    %1986 = vmatprep.subr.mxu0 0.0
    %1987 = vmatpush1.msra.mxu0 0.0
    %1988 = vmatprep.subr.mxu0 0.0
    %1989 = vmatpush1.msra.mxu0 0.0
    %1990 = vmatprep.subr.mxu0 0.0
    %1991 = vmatpush1.msra.mxu0 0.0
    %1992 = vmatprep.subr.mxu0 0.0
    %1993 = vmatpush1.msra.mxu0 0.0
    %1994 = vmatprep.subr.mxu0 0.0
    %1995 = vmatpush1.msra.mxu0 0.0
    %1996 = vmatprep.subr.mxu0 0.0
    %1997 = vmatpush1.msra.mxu0 0.0
    %1998 = vmatprep.subr.mxu0 0.0
    %1999 = vmatpush1.msra.mxu0 0.0
    %2000 = vmatprep.subr.mxu0 0.0
    %2001 = vmatpush1.msra.mxu0 0.0
    %2002 = vmatprep.subr.mxu0 0.0
    %2003 = vmatpush1.msra.mxu0 0.0
    %2004 = vmatprep.subr.mxu0 0.0
    %2005 = vmatpush1.msra.mxu0 0.0
    %2006 = vmatprep.subr.mxu0 0.0
    %2007 = vmatpush1.msra.mxu0 0.0
    %2008 = vmatprep.subr.mxu0 0.0
    %2009 = vmatpush1.msra.mxu0 0.0
    %2010 = vmatprep.subr.mxu0 0.0
    %2011 = vmatpush1.msra.mxu0 0.0
    %2012 = vmatprep.subr.mxu0 0.0
    %2013 = vmatpush1.msra.mxu0 0.0
    %2014 = vmatprep.subr.mxu0 0.0
    %2015 = vmatpush1.msra.mxu0 0.0
    %2016 = vmatprep.mubr.f32.mxu0 0.0
    %2017 = vmatmul.mubr.f32.gmra.mrb[0].mxu0 %v1950
    %v2018 = vpop.f32.mrb[0].mxu0
    %v2019 = vadd.f32 0.0, %v2018
    %v2020 = vpop.f32.mrb[0].mxu0
    %2021 = vdwg.mxu0
    %v2023 = vrot.slane %v2019, 6
    %2024 = vrot.lane.b32.xlu0 %v2023, 32
    %v2025 = vpop.permute.xlu0 %2024
    %v2027 = vadd.f32 %v1097, %v2025
    %v2028 = vtanh.pop %v2027
    %2030 = vrot.lane.b32.xlu0 %v2028, 96
    %v2031 = vpop.permute.xlu0 %2030
    %v2034 = vrot.slane %v1948, 6
    %2035 = vrot.lane.b32.xlu0 %v2034, 32
    %v2036 = vpop.permute.xlu0 %2035
    %v2038 = vsel %vm1118, %v2031, %v2036
    %v2040 = vrot.slane %v2038, 2
    %v2041 = vsel %vm1207, %v2040, 0
    %2043 = vmatprep.subr.mxu0 0.0
    %2044 = vmatpush1.msra.mxu0 %v1102
    %2045 = vmatprep.subr.mxu0 0.0
    %2046 = vmatpush1.msra.mxu0 %v1103
    %2047 = vmatprep.subr.mxu0 0.0
    %2048 = vmatpush1.msra.mxu0 %v1104
    %2049 = vmatprep.subr.mxu0 0.0
    %2050 = vmatpush1.msra.mxu0 %v1105
    %2051 = vmatprep.subr.mxu0 0.0
    %2052 = vmatpush1.msra.mxu0 %v1106
    %2053 = vmatprep.subr.mxu0 0.0
    %2054 = vmatpush1.msra.mxu0 %v1107
    %2055 = vmatprep.subr.mxu0 0.0
    %2056 = vmatpush1.msra.mxu0 %v1108
    %2057 = vmatprep.subr.mxu0 0.0
    %2058 = vmatpush1.msra.mxu0 %v1109
    %2059 = vmatprep.subr.mxu0 0.0
    %2060 = vmatpush1.msra.mxu0 0.0
    %2061 = vmatprep.subr.mxu0 0.0
    %2062 = vmatpush1.msra.mxu0 0.0
    %2063 = vmatprep.subr.mxu0 0.0
    %2064 = vmatpush1.msra.mxu0 0.0
    %2065 = vmatprep.subr.mxu0 0.0
    %2066 = vmatpush1.msra.mxu0 0.0
    %2067 = vmatprep.subr.mxu0 0.0
    %2068 = vmatpush1.msra.mxu0 0.0
    %2069 = vmatprep.subr.mxu0 0.0
    %2070 = vmatpush1.msra.mxu0 0.0
    %2071 = vmatprep.subr.mxu0 0.0
    %2072 = vmatpush1.msra.mxu0 0.0
    %2073 = vmatprep.subr.mxu0 0.0
    %2074 = vmatpush1.msra.mxu0 0.0
    %2075 = vmatprep.subr.mxu0 0.0
    %2076 = vmatpush1.msra.mxu0 0.0
    %2077 = vmatprep.subr.mxu0 0.0
    %2078 = vmatpush1.msra.mxu0 0.0
    %2079 = vmatprep.subr.mxu0 0.0
    %2080 = vmatpush1.msra.mxu0 0.0
    %2081 = vmatprep.subr.mxu0 0.0
    %2082 = vmatpush1.msra.mxu0 0.0
    %2083 = vmatprep.subr.mxu0 0.0
    %2084 = vmatpush1.msra.mxu0 0.0
    %2085 = vmatprep.subr.mxu0 0.0
    %2086 = vmatpush1.msra.mxu0 0.0
    %2087 = vmatprep.subr.mxu0 0.0
    %2088 = vmatpush1.msra.mxu0 0.0
    %2089 = vmatprep.subr.mxu0 0.0
    %2090 = vmatpush1.msra.mxu0 0.0
    %2091 = vmatprep.subr.mxu0 0.0
    %2092 = vmatpush1.msra.mxu0 0.0
    %2093 = vmatprep.subr.mxu0 0.0
    %2094 = vmatpush1.msra.mxu0 0.0
    %2095 = vmatprep.subr.mxu0 0.0
    %2096 = vmatpush1.msra.mxu0 0.0
    %2097 = vmatprep.subr.mxu0 0.0
    %2098 = vmatpush1.msra.mxu0 0.0
    %2099 = vmatprep.subr.mxu0 0.0
    %2100 = vmatpush1.msra.mxu0 0.0
    %2101 = vmatprep.subr.mxu0 0.0
    %2102 = vmatpush1.msra.mxu0 0.0
    %2103 = vmatprep.subr.mxu0 0.0
    %2104 = vmatpush1.msra.mxu0 0.0
    %2105 = vmatprep.subr.mxu0 0.0
    %2106 = vmatpush1.msra.mxu0 0.0
    %2107 = vmatprep.mubr.f32.mxu0 0.0
    %2108 = vmatmul.mubr.f32.gmra.mrb[0].mxu0 %v2041
    %v2109 = vpop.f32.mrb[0].mxu0
    %v2110 = vadd.f32 %v1114, %v2109
    %v2111 = vpop.f32.mrb[0].mxu0
    %2112 = vdwg.mxu0
    %v2113 = vtanh.pop %v2110
    %2114 = vst.msk [vmem:[#allocation2 + $0xa] sm:$0x3] %vm1282, %v2113
    %v2115 = vrot.slane %v2028, 2
    %2116 = vrot.lane.b32.xlu0 %v2115, 96
    %v2117 = vpop.permute.xlu0 %2116
    %v2118 = vsel %vm1118, %v2117, 0
    %2120 = vmatprep.subr.mxu0 0.0
    %2121 = vmatpush1.msra.mxu0 %v1098
    %2122 = vmatprep.subr.mxu0 0.0
    %2123 = vmatpush1.msra.mxu0 %v1099
    %2124 = vmatprep.subr.mxu0 0.0
    %2125 = vmatpush1.msra.mxu0 %v1100
    %2126 = vmatprep.subr.mxu0 0.0
    %2127 = vmatpush1.msra.mxu0 %v1101
    %2128 = vmatprep.subr.mxu0 0.0
    %2129 = vmatpush1.msra.mxu0 0.0
    %2130 = vmatprep.subr.mxu0 0.0
    %2131 = vmatpush1.msra.mxu0 0.0
    %2132 = vmatprep.subr.mxu0 0.0
    %2133 = vmatpush1.msra.mxu0 0.0
    %2134 = vmatprep.subr.mxu0 0.0
    %2135 = vmatpush1.msra.mxu0 0.0
    %2136 = vmatprep.subr.mxu0 0.0
    %2137 = vmatpush1.msra.mxu0 0.0
    %2138 = vmatprep.subr.mxu0 0.0
    %2139 = vmatpush1.msra.mxu0 0.0
    %2140 = vmatprep.subr.mxu0 0.0
    %2141 = vmatpush1.msra.mxu0 0.0
    %2142 = vmatprep.subr.mxu0 0.0
    %2143 = vmatpush1.msra.mxu0 0.0
    %2144 = vmatprep.subr.mxu0 0.0
    %2145 = vmatpush1.msra.mxu0 0.0
    %2146 = vmatprep.subr.mxu0 0.0
    %2147 = vmatpush1.msra.mxu0 0.0
    %2148 = vmatprep.subr.mxu0 0.0
    %2149 = vmatpush1.msra.mxu0 0.0
    %2150 = vmatprep.subr.mxu0 0.0
    %2151 = vmatpush1.msra.mxu0 0.0
    %2152 = vmatprep.subr.mxu0 0.0
    %2153 = vmatpush1.msra.mxu0 0.0
    %2154 = vmatprep.subr.mxu0 0.0
    %2155 = vmatpush1.msra.mxu0 0.0
    %2156 = vmatprep.subr.mxu0 0.0
    %2157 = vmatpush1.msra.mxu0 0.0
    %2158 = vmatprep.subr.mxu0 0.0
    %2159 = vmatpush1.msra.mxu0 0.0
    %2160 = vmatprep.subr.mxu0 0.0
    %2161 = vmatpush1.msra.mxu0 0.0
    %2162 = vmatprep.subr.mxu0 0.0
    %2163 = vmatpush1.msra.mxu0 0.0
    %2164 = vmatprep.subr.mxu0 0.0
    %2165 = vmatpush1.msra.mxu0 0.0
    %2166 = vmatprep.subr.mxu0 0.0
    %2167 = vmatpush1.msra.mxu0 0.0
    %2168 = vmatprep.subr.mxu0 0.0
    %2169 = vmatpush1.msra.mxu0 0.0
    %2170 = vmatprep.subr.mxu0 0.0
    %2171 = vmatpush1.msra.mxu0 0.0
    %2172 = vmatprep.subr.mxu0 0.0
    %2173 = vmatpush1.msra.mxu0 0.0
    %2174 = vmatprep.subr.mxu0 0.0
    %2175 = vmatpush1.msra.mxu0 0.0
    %2176 = vmatprep.subr.mxu0 0.0
    %2177 = vmatpush1.msra.mxu0 0.0
    %2178 = vmatprep.subr.mxu0 0.0
    %2179 = vmatpush1.msra.mxu0 0.0
    %2180 = vmatprep.subr.mxu0 0.0
    %2181 = vmatpush1.msra.mxu0 0.0
    %2182 = vmatprep.subr.mxu0 0.0
    %2183 = vmatpush1.msra.mxu0 0.0
    %2184 = vmatprep.mubr.f32.mxu0 0.0
    %2185 = vmatmul.mubr.f32.gmra.mrb[0].mxu0 %v2118
    %v2186 = vpop.f32.mrb[0].mxu0
    %v2187 = vadd.f32 0.0, %v2186
    %v2188 = vpop.f32.mrb[0].mxu0
    %2189 = vdwg.mxu0
    %v2191 = vrot.slane %v2187, 4
    %2192 = vrot.lane.b32.xlu0 %v2191, 32
    %v2193 = vpop.permute.xlu0 %2192
    %v2195 = vadd.f32 %v1097, %v2193
    %v2196 = vtanh.pop %v2195
    %2198 = vrot.lane.b32.xlu0 %v2196, 96
    %v2199 = vpop.permute.xlu0 %2198
    %v2202 = vrot.slane %v2113, 4
    %2203 = vrot.lane.b32.xlu0 %v2202, 32
    %v2204 = vpop.permute.xlu0 %2203
    %v2206 = vsel %vm1118, %v2199, %v2204
    %v2208 = vrot.slane %v2206, 4
    %v2209 = vsel %vm1207, %v2208, 0
    %2211 = vmatprep.subr.mxu0 0.0
    %2212 = vmatpush1.msra.mxu0 %v1102
    %2213 = vmatprep.subr.mxu0 0.0
    %2214 = vmatpush1.msra.mxu0 %v1103
    %2215 = vmatprep.subr.mxu0 0.0
    %2216 = vmatpush1.msra.mxu0 %v1104
    %2217 = vmatprep.subr.mxu0 0.0
    %2218 = vmatpush1.msra.mxu0 %v1105
    %2219 = vmatprep.subr.mxu0 0.0
    %2220 = vmatpush1.msra.mxu0 %v1106
    %2221 = vmatprep.subr.mxu0 0.0
    %2222 = vmatpush1.msra.mxu0 %v1107
    %2223 = vmatprep.subr.mxu0 0.0
    %2224 = vmatpush1.msra.mxu0 %v1108
    %2225 = vmatprep.subr.mxu0 0.0
    %2226 = vmatpush1.msra.mxu0 %v1109
    %2227 = vmatprep.subr.mxu0 0.0
    %2228 = vmatpush1.msra.mxu0 0.0
    %2229 = vmatprep.subr.mxu0 0.0
    %2230 = vmatpush1.msra.mxu0 0.0
    %2231 = vmatprep.subr.mxu0 0.0
    %2232 = vmatpush1.msra.mxu0 0.0
    %2233 = vmatprep.subr.mxu0 0.0
    %2234 = vmatpush1.msra.mxu0 0.0
    %2235 = vmatprep.subr.mxu0 0.0
    %2236 = vmatpush1.msra.mxu0 0.0
    %2237 = vmatprep.subr.mxu0 0.0
    %2238 = vmatpush1.msra.mxu0 0.0
    %2239 = vmatprep.subr.mxu0 0.0
    %2240 = vmatpush1.msra.mxu0 0.0
    %2241 = vmatprep.subr.mxu0 0.0
    %2242 = vmatpush1.msra.mxu0 0.0
    %2243 = vmatprep.subr.mxu0 0.0
    %2244 = vmatpush1.msra.mxu0 0.0
    %2245 = vmatprep.subr.mxu0 0.0
    %2246 = vmatpush1.msra.mxu0 0.0
    %2247 = vmatprep.subr.mxu0 0.0
    %2248 = vmatpush1.msra.mxu0 0.0
    %2249 = vmatprep.subr.mxu0 0.0
    %2250 = vmatpush1.msra.mxu0 0.0
    %2251 = vmatprep.subr.mxu0 0.0
    %2252 = vmatpush1.msra.mxu0 0.0
    %2253 = vmatprep.subr.mxu0 0.0
    %2254 = vmatpush1.msra.mxu0 0.0
    %2255 = vmatprep.subr.mxu0 0.0
    %2256 = vmatpush1.msra.mxu0 0.0
    %2257 = vmatprep.subr.mxu0 0.0
    %2258 = vmatpush1.msra.mxu0 0.0
    %2259 = vmatprep.subr.mxu0 0.0
    %2260 = vmatpush1.msra.mxu0 0.0
    %2261 = vmatprep.subr.mxu0 0.0
    %2262 = vmatpush1.msra.mxu0 0.0
    %2263 = vmatprep.subr.mxu0 0.0
    %2264 = vmatpush1.msra.mxu0 0.0
    %2265 = vmatprep.subr.mxu0 0.0
    %2266 = vmatpush1.msra.mxu0 0.0
    %2267 = vmatprep.subr.mxu0 0.0
    %2268 = vmatpush1.msra.mxu0 0.0
    %2269 = vmatprep.subr.mxu0 0.0
    %2270 = vmatpush1.msra.mxu0 0.0
    %2271 = vmatprep.subr.mxu0 0.0
    %2272 = vmatpush1.msra.mxu0 0.0
    %2273 = vmatprep.subr.mxu0 0.0
    %2274 = vmatpush1.msra.mxu0 0.0
    %2275 = vmatprep.mubr.f32.mxu0 0.0
    %2276 = vmatmul.mubr.f32.gmra.mrb[0].mxu0 %v2209
    %v2277 = vpop.f32.mrb[0].mxu0
    %v2278 = vadd.f32 %v1114, %v2277
    %v2279 = vpop.f32.mrb[0].mxu0
    %2280 = vdwg.mxu0
    %v2281 = vtanh.pop %v2278
    %2282 = vst.msk [vmem:[#allocation2 + $0xc] sm:$0x3] %vm1282, %v2281
    %v2283 = vrot.slane %v2196, 4
    %2284 = vrot.lane.b32.xlu0 %v2283, 96
    %v2285 = vpop.permute.xlu0 %2284
    %v2286 = vsel %vm1118, %v2285, 0
    %2288 = vmatprep.subr.mxu0 0.0
    %2289 = vmatpush1.msra.mxu0 %v1098
    %2290 = vmatprep.subr.mxu0 0.0
    %2291 = vmatpush1.msra.mxu0 %v1099
    %2292 = vmatprep.subr.mxu0 0.0
    %2293 = vmatpush1.msra.mxu0 %v1100
    %2294 = vmatprep.subr.mxu0 0.0
    %2295 = vmatpush1.msra.mxu0 %v1101
    %2296 = vmatprep.subr.mxu0 0.0
    %2297 = vmatpush1.msra.mxu0 0.0
    %2298 = vmatprep.subr.mxu0 0.0
    %2299 = vmatpush1.msra.mxu0 0.0
    %2300 = vmatprep.subr.mxu0 0.0
    %2301 = vmatpush1.msra.mxu0 0.0
    %2302 = vmatprep.subr.mxu0 0.0
    %2303 = vmatpush1.msra.mxu0 0.0
    %2304 = vmatprep.subr.mxu0 0.0
    %2305 = vmatpush1.msra.mxu0 0.0
    %2306 = vmatprep.subr.mxu0 0.0
    %2307 = vmatpush1.msra.mxu0 0.0
    %2308 = vmatprep.subr.mxu0 0.0
    %2309 = vmatpush1.msra.mxu0 0.0
    %2310 = vmatprep.subr.mxu0 0.0
    %2311 = vmatpush1.msra.mxu0 0.0
    %2312 = vmatprep.subr.mxu0 0.0
    %2313 = vmatpush1.msra.mxu0 0.0
    %2314 = vmatprep.subr.mxu0 0.0
    %2315 = vmatpush1.msra.mxu0 0.0
    %2316 = vmatprep.subr.mxu0 0.0
    %2317 = vmatpush1.msra.mxu0 0.0
    %2318 = vmatprep.subr.mxu0 0.0
    %2319 = vmatpush1.msra.mxu0 0.0
    %2320 = vmatprep.subr.mxu0 0.0
    %2321 = vmatpush1.msra.mxu0 0.0
    %2322 = vmatprep.subr.mxu0 0.0
    %2323 = vmatpush1.msra.mxu0 0.0
    %2324 = vmatprep.subr.mxu0 0.0
    %2325 = vmatpush1.msra.mxu0 0.0
    %2326 = vmatprep.subr.mxu0 0.0
    %2327 = vmatpush1.msra.mxu0 0.0
    %2328 = vmatprep.subr.mxu0 0.0
    %2329 = vmatpush1.msra.mxu0 0.0
    %2330 = vmatprep.subr.mxu0 0.0
    %2331 = vmatpush1.msra.mxu0 0.0
    %2332 = vmatprep.subr.mxu0 0.0
    %2333 = vmatpush1.msra.mxu0 0.0
    %2334 = vmatprep.subr.mxu0 0.0
    %2335 = vmatpush1.msra.mxu0 0.0
    %2336 = vmatprep.subr.mxu0 0.0
    %2337 = vmatpush1.msra.mxu0 0.0
    %2338 = vmatprep.subr.mxu0 0.0
    %2339 = vmatpush1.msra.mxu0 0.0
    %2340 = vmatprep.subr.mxu0 0.0
    %2341 = vmatpush1.msra.mxu0 0.0
    %2342 = vmatprep.subr.mxu0 0.0
    %2343 = vmatpush1.msra.mxu0 0.0
    %2344 = vmatprep.subr.mxu0 0.0
    %2345 = vmatpush1.msra.mxu0 0.0
    %2346 = vmatprep.subr.mxu0 0.0
    %2347 = vmatpush1.msra.mxu0 0.0
    %2348 = vmatprep.subr.mxu0 0.0
    %2349 = vmatpush1.msra.mxu0 0.0
    %2350 = vmatprep.subr.mxu0 0.0
    %2351 = vmatpush1.msra.mxu0 0.0
    %2352 = vmatprep.mubr.f32.mxu0 0.0
    %2353 = vmatmul.mubr.f32.gmra.mrb[0].mxu0 %v2286
    %v2354 = vpop.f32.mrb[0].mxu0
    %v2355 = vadd.f32 0.0, %v2354
    %v2356 = vpop.f32.mrb[0].mxu0
    %2357 = vdwg.mxu0
    %v2359 = vrot.slane %v2355, 2
    %2360 = vrot.lane.b32.xlu0 %v2359, 32
    %v2361 = vpop.permute.xlu0 %2360
    %v2363 = vadd.f32 %v1097, %v2361
    %v2364 = vtanh.pop %v2363
    %2366 = vrot.lane.b32.xlu0 %v2364, 96
    %v2367 = vpop.permute.xlu0 %2366
    %v2370 = vrot.slane %v2281, 2
    %2371 = vrot.lane.b32.xlu0 %v2370, 32
    %v2372 = vpop.permute.xlu0 %2371
    %v2374 = vsel %vm1118, %v2367, %v2372
    %v2376 = vrot.slane %v2374, 6
    %v2377 = vsel %vm1207, %v2376, 0
    %2379 = vmatprep.subr.mxu0 0.0
    %2380 = vmatpush1.msra.mxu0 %v1102
    %2381 = vmatprep.subr.mxu0 0.0
    %2382 = vmatpush1.msra.mxu0 %v1103
    %2383 = vmatprep.subr.mxu0 0.0
    %2384 = vmatpush1.msra.mxu0 %v1104
    %2385 = vmatprep.subr.mxu0 0.0
    %2386 = vmatpush1.msra.mxu0 %v1105
    %2387 = vmatprep.subr.mxu0 0.0
    %2388 = vmatpush1.msra.mxu0 %v1106
    %2389 = vmatprep.subr.mxu0 0.0
    %2390 = vmatpush1.msra.mxu0 %v1107
    %2391 = vmatprep.subr.mxu0 0.0
    %2392 = vmatpush1.msra.mxu0 %v1108
    %2393 = vmatprep.subr.mxu0 0.0
    %2394 = vmatpush1.msra.mxu0 %v1109
    %2395 = vmatprep.subr.mxu0 0.0
    %2396 = vmatpush1.msra.mxu0 0.0
    %2397 = vmatprep.subr.mxu0 0.0
    %2398 = vmatpush1.msra.mxu0 0.0
    %2399 = vmatprep.subr.mxu0 0.0
    %2400 = vmatpush1.msra.mxu0 0.0
    %2401 = vmatprep.subr.mxu0 0.0
    %2402 = vmatpush1.msra.mxu0 0.0
    %2403 = vmatprep.subr.mxu0 0.0
    %2404 = vmatpush1.msra.mxu0 0.0
    %2405 = vmatprep.subr.mxu0 0.0
    %2406 = vmatpush1.msra.mxu0 0.0
    %2407 = vmatprep.subr.mxu0 0.0
    %2408 = vmatpush1.msra.mxu0 0.0
    %2409 = vmatprep.subr.mxu0 0.0
    %2410 = vmatpush1.msra.mxu0 0.0
    %2411 = vmatprep.subr.mxu0 0.0
    %2412 = vmatpush1.msra.mxu0 0.0
    %2413 = vmatprep.subr.mxu0 0.0
    %2414 = vmatpush1.msra.mxu0 0.0
    %2415 = vmatprep.subr.mxu0 0.0
    %2416 = vmatpush1.msra.mxu0 0.0
    %2417 = vmatprep.subr.mxu0 0.0
    %2418 = vmatpush1.msra.mxu0 0.0
    %2419 = vmatprep.subr.mxu0 0.0
    %2420 = vmatpush1.msra.mxu0 0.0
    %2421 = vmatprep.subr.mxu0 0.0
    %2422 = vmatpush1.msra.mxu0 0.0
    %2423 = vmatprep.subr.mxu0 0.0
    %2424 = vmatpush1.msra.mxu0 0.0
    %2425 = vmatprep.subr.mxu0 0.0
    %2426 = vmatpush1.msra.mxu0 0.0
    %2427 = vmatprep.subr.mxu0 0.0
    %2428 = vmatpush1.msra.mxu0 0.0
    %2429 = vmatprep.subr.mxu0 0.0
    %2430 = vmatpush1.msra.mxu0 0.0
    %2431 = vmatprep.subr.mxu0 0.0
    %2432 = vmatpush1.msra.mxu0 0.0
    %2433 = vmatprep.subr.mxu0 0.0
    %2434 = vmatpush1.msra.mxu0 0.0
    %2435 = vmatprep.subr.mxu0 0.0
    %2436 = vmatpush1.msra.mxu0 0.0
    %2437 = vmatprep.subr.mxu0 0.0
    %2438 = vmatpush1.msra.mxu0 0.0
    %2439 = vmatprep.subr.mxu0 0.0
    %2440 = vmatpush1.msra.mxu0 0.0
    %2441 = vmatprep.subr.mxu0 0.0
    %2442 = vmatpush1.msra.mxu0 0.0
    %2443 = vmatprep.mubr.f32.mxu0 0.0
    %2444 = vmatmul.mubr.f32.gmra.mrb[0].mxu0 %v2377
    %v2445 = vpop.f32.mrb[0].mxu0
    %v2446 = vadd.f32 %v1114, %v2445
    %v2447 = vpop.f32.mrb[0].mxu0
    %2448 = vdwg.mxu0
    %v2449 = vtanh.pop %v2446
    %2450 = vst.msk [vmem:[#allocation2 + $0xe] sm:$0x3] %vm1282, %v2449
    %vm2451 = vcmask 261126
    %2452 = vst.msk [vmem:[#allocation5 - $0x6] sm:$0xc0] %vm2451, %v2367
    %s2453 = scalar_lea.vmem [#allocation5], 2
    %2454 = vst.msk [vmem:[%s2453] sm:$0x3] %vm1282, %v2449
    %v2455 = vld [vmem:[#allocation2] sm:$0xff]
    %v2456 = vld [vmem:[#allocation2 + $0x8] sm:$0xff]
    %v2457 = vld [vmem:[%s2 + $0x200] sm:$0xff]
    %v2458 = vld [vmem:[%s2 + $0x208] sm:$0xff]
    %v2459 = vld [vmem:[%s2 + $0x210] sm:$0xff]
    %v2460 = vld [vmem:[%s2 + $0x218] sm:$0xff]
    %v2461 = vld [vmem:[%s2 + $0x224] sm:$0x1]
    %v2462 = vlaneseq
    %v2463 = vshrl.u32 %v2462, 7
    %v2464 = vsub.s32 0, %v2463
    %v2465 = vrot.slane %v2461, %v2464
    %v2467 = vsel %vm1118, %v2455, 0
    %v2470 = vsel %vm1118, %v2456, 0
    %2472 = vmatprep.subr.mxu0 0.0
    %2473 = vmatpush1.msra.mxu0 %v2457
    %2474 = vmatprep.subr.mxu0 0.0
    %2475 = vmatpush1.msra.mxu0 %v2458
    %2476 = vmatprep.subr.mxu0 0.0
    %2477 = vmatpush1.msra.mxu0 %v2459
    %2478 = vmatprep.subr.mxu0 0.0
    %2479 = vmatpush1.msra.mxu0 %v2460
    %2480 = vmatprep.subr.mxu0 0.0
    %2481 = vmatpush1.msra.mxu0 0.0
    %2482 = vmatprep.subr.mxu0 0.0
    %2483 = vmatpush1.msra.mxu0 0.0
    %2484 = vmatprep.subr.mxu0 0.0
    %2485 = vmatpush1.msra.mxu0 0.0
    %2486 = vmatprep.subr.mxu0 0.0
    %2487 = vmatpush1.msra.mxu0 0.0
    %2488 = vmatprep.subr.mxu0 0.0
    %2489 = vmatpush1.msra.mxu0 0.0
    %2490 = vmatprep.subr.mxu0 0.0
    %2491 = vmatpush1.msra.mxu0 0.0
    %2492 = vmatprep.subr.mxu0 0.0
    %2493 = vmatpush1.msra.mxu0 0.0
    %2494 = vmatprep.subr.mxu0 0.0
    %2495 = vmatpush1.msra.mxu0 0.0
    %2496 = vmatprep.subr.mxu0 0.0
    %2497 = vmatpush1.msra.mxu0 0.0
    %2498 = vmatprep.subr.mxu0 0.0
    %2499 = vmatpush1.msra.mxu0 0.0
    %2500 = vmatprep.subr.mxu0 0.0
    %2501 = vmatpush1.msra.mxu0 0.0
    %2502 = vmatprep.subr.mxu0 0.0
    %2503 = vmatpush1.msra.mxu0 0.0
    %2504 = vmatprep.subr.mxu0 0.0
    %2505 = vmatpush1.msra.mxu0 0.0
    %2506 = vmatprep.subr.mxu0 0.0
    %2507 = vmatpush1.msra.mxu0 0.0
    %2508 = vmatprep.subr.mxu0 0.0
    %2509 = vmatpush1.msra.mxu0 0.0
    %2510 = vmatprep.subr.mxu0 0.0
    %2511 = vmatpush1.msra.mxu0 0.0
    %2512 = vmatprep.subr.mxu0 0.0
    %2513 = vmatpush1.msra.mxu0 0.0
    %2514 = vmatprep.subr.mxu0 0.0
    %2515 = vmatpush1.msra.mxu0 0.0
    %2516 = vmatprep.subr.mxu0 0.0
    %2517 = vmatpush1.msra.mxu0 0.0
    %2518 = vmatprep.subr.mxu0 0.0
    %2519 = vmatpush1.msra.mxu0 0.0
    %2520 = vmatprep.subr.mxu0 0.0
    %2521 = vmatpush1.msra.mxu0 0.0
    %2522 = vmatprep.subr.mxu0 0.0
    %2523 = vmatpush1.msra.mxu0 0.0
    %2524 = vmatprep.subr.mxu0 0.0
    %2525 = vmatpush1.msra.mxu0 0.0
    %2526 = vmatprep.subr.mxu0 0.0
    %2527 = vmatpush1.msra.mxu0 0.0
    %2528 = vmatprep.subr.mxu0 0.0
    %2529 = vmatpush1.msra.mxu0 0.0
    %2530 = vmatprep.subr.mxu0 0.0
    %2531 = vmatpush1.msra.mxu0 0.0
    %2532 = vmatprep.subr.mxu0 0.0
    %2533 = vmatpush1.msra.mxu0 0.0
    %2534 = vmatprep.subr.mxu0 0.0
    %2535 = vmatpush1.msra.mxu0 0.0
    %2536 = vmatprep.mubr.f32.mxu0 0.0
    %2537 = vmatmul.mubr.f32.gmra.mrb[0].mxu0 %v2467
    %v2538 = vpop.f32.mrb[0].mxu0
    %v2539 = vadd.f32 %v2465, %v2538
    %v2540 = vpop.f32.mrb[0].mxu0
    %2541 = vmatprep.mubr.f32.mxu0 0.0
    %2542 = vmatmul.mubr.f32.gmra.mrb[0].mxu0 %v2470
    %v2543 = vpop.f32.mrb[0].mxu0
    %v2544 = vadd.f32 %v2465, %v2543
    %v2545 = vpop.f32.mrb[0].mxu0
    %2546 = vdwg.mxu0
    %2547 = vst [vmem:[#allocation3] sm:$0xff] %v2539
    %2548 = vst [vmem:[#allocation3 + $0x8] sm:$0xff] %v2544
    // Predicated region
    $region14: #{rnn_model_forward.1} parent=1 // pred_check
      _
    $region15: #{rnn_model_forward.1} parent=1 // pred_check_branch
      %2550 = sbr.rel (0) target = $region17
    $region16: #{rnn_model_forward.1} parent=1 // pred_region
      %s2552 = ssub.s32 256, 256
      %2553 = vsyncadd [#allocation4], %s2552
      %s2554 = sshll.u32 [#allocation3], 4
      %s2555 = int_to_ptr.vmem [resolvable:$true] %s2554
      %2560 = dma.vmem_to_hbm [thread:$0]  %s2555, 256, %s3, [#allocation4], 128, 128, 8
    $region17: #{rnn_model_forward.1} parent=1 // pred_fallthru
      _
    // Predicated region
    $region18: #{rnn_model_forward.1} parent=1 // pred_check
      _
    $region19: #{rnn_model_forward.1} parent=1 // pred_check_branch
      %2562 = sbr.rel (0) target = $region21
    $region20: #{rnn_model_forward.1} parent=1 // pred_region
      %s2564 = ssub.s32 64, 64
      %2565 = vsyncadd [#allocation6], %s2564
      %s2566 = sshll.u32 [#allocation5], 4
      %s2567 = int_to_ptr.vmem [resolvable:$true] %s2566
      %2572 = dma.vmem_to_hbm [thread:$0]  %s2567, 64, %s4, [#allocation6], 32, 32, 2
    $region21: #{rnn_model_forward.1} parent=1 // pred_fallthru
      _
    // Predicated region
    $region22: #{rnn_model_forward.1} parent=1 // pred_check
      _
    $region23: #{rnn_model_forward.1} parent=1 // pred_check_branch
      %2574 = sbr.rel (0) target = $region25
    $region24: #{rnn_model_forward.1} parent=1 // pred_region
      %2575 = dma.done [#allocation4], 256
    $region25: #{rnn_model_forward.1} parent=1 // pred_fallthru
      _
    // Predicated region
    $region26: #{rnn_model_forward.1} parent=1 // pred_check
      _
    $region27: #{rnn_model_forward.1} parent=1 // pred_check_branch
      %2577 = sbr.rel (0) target = $region29
    $region28: #{rnn_model_forward.1} parent=1 // pred_region
      %2578 = dma.done [#allocation6], 64
    $region29: #{rnn_model_forward.1} parent=1 // pred_fallthru
      _
    %2579 = vsyncpa [#allocation4], 1
    %2580 = vsyncpa [#allocation6], 1

</llo_original>
